<compile_context>
chip_gen: v7x
topology: tpu7x:2x2x1
jax: 0.10.0
libtpu: 0.0.40
codegen_flags: <defaults>
</compile_context>

<pallas_src>
import functools

import jax
import jax.numpy as jnp
from jax.experimental import pallas as pl
from jax.experimental.pallas import tpu as pltpu


def _round_up(x, m):
    return ((x + m - 1) // m) * m


# --------------------------------------------------------------------------
# Kernel: one SAGEConv layer.  Grid = (row tiles, adjacency column blocks).
# --------------------------------------------------------------------------
def _sage_layer_kernel(nblk_ref, cols_ref,            # scalar-prefetch (SMEM)
                       adj_ref, xsrc_ref, xtile_ref, invdeg_ref,
                       wl_ref, wr_ref, b_ref,
                       o_ref,
                       acc_ref,
                       *, apply_relu):
    i = pl.program_id(0)
    k = pl.program_id(1)
    nk = pl.num_programs(1)

    @pl.when(k == 0)
    def _():
        acc_ref[...] = jnp.zeros_like(acc_ref)

    # Accumulate the neighbor-feature SUM for this (row tile, source block).
    # Only blocks that actually contain edges contribute (block-sparse skip);
    # padding steps revisit the previous block index so their DMA is elided.
    @pl.when(k < nblk_ref[i])
    def _():
        a = adj_ref[...].astype(jnp.bfloat16)          # int8 counts -> bf16 (VPU)
        acc_ref[...] += jnp.dot(a, xsrc_ref[...],
                                preferred_element_type=jnp.float32)

    # Epilogue: mean scaling (f32), fused dual projection, bias, ReLU.
    @pl.when(k == nk - 1)
    def _():
        aggr = acc_ref[...] * invdeg_ref[...]          # f32 1/deg (no bf16 quant)
        out = jnp.dot(aggr.astype(jnp.bfloat16), wl_ref[...],
                      preferred_element_type=jnp.float32)
        out = out + jnp.dot(xtile_ref[...], wr_ref[...],
                            preferred_element_type=jnp.float32)
        out = out + b_ref[...]
        if apply_relu:
            out = jnp.maximum(out, 0.0)
        o_ref[...] = out.astype(o_ref.dtype)


def sage_conv_layer(adj, x, inv_deg, nblk, cols, wl_t, wr_t, bias2d, *,
                    apply_relu, out_dtype, block_rows=256, block_k=512):
    """One SAGEConv layer as a single K-tiled, block-sparse Pallas kernel.

    adj     : (N_pad, N_pad) int8 edge counts (zero-padded)
    x       : (N_pad, F_in_pad) bf16 node features (zero-padded)
    inv_deg : (N_pad, 1) f32 inverse in-degree (0 for isolated/padded rows)
    nblk    : (N_pad//TM,) int32          # non-empty column blocks per row tile
    cols    : (N_pad//TM, N_pad//TK) int32  # compacted column-block indices
    wl_t    : (F_in_pad, F_out_pad) bf16 transposed lin_l weight
    wr_t    : (F_in_pad, F_out_pad) bf16 transposed lin_r weight
    bias2d  : (1, F_out_pad) f32 lin_l bias

    block_rows: 256 on v6e/v7x (2x256x256 MXU), 128 on v5e.
    """
    n_pad, f_in_pad = x.shape
    f_out_pad = wl_t.shape[1]
    tm = min(block_rows, n_pad)
    tk = min(block_k, n_pad)
    assert n_pad % tm == 0 and n_pad % tk == 0, "N_pad must be a tile multiple"
    n_r, n_k = n_pad // tm, n_pad // tk
    out_bytes = jnp.dtype(out_dtype).itemsize

    kernel = functools.partial(_sage_layer_kernel, apply_relu=apply_relu)

    # Advisory cost model for XLA scheduling around the custom call.
    flops = 2 * n_pad * n_pad * f_in_pad + 4 * n_pad * f_in_pad * f_out_pad
    bytes_accessed = (n_pad * n_pad                       # int8 adjacency stream
                      + n_r * n_pad * f_in_pad * 2        # k-streamed X (per row tile)
                      + n_pad * f_in_pad * 2              # self/root X tiles
                      + 2 * f_in_pad * f_out_pad * 2      # Wl^T, Wr^T
                      + n_pad * 4 + f_out_pad * 4         # inv_deg + bias
                      + n_pad * f_out_pad * out_bytes)    # output

    # Explicit VMEM budget (double buffers on streamed inputs + scratch).
    vmem_need = (2 * tm * tk * 1
                 + 2 * tk * f_in_pad * 2
                 + 2 * tm * f_in_pad * 2
                 + 2 * tm * 4
                 + 2 * 2 * f_in_pad * f_out_pad * 2
                 + 2 * f_out_pad * 4
                 + 2 * tm * f_out_pad * out_bytes
                 + tm * f_in_pad * 4)
    vmem_limit = int(min(max(2 * vmem_need + (8 << 20), 32 << 20), 64 << 20))

    return pl.pallas_call(
        kernel,
        out_shape=jax.ShapeDtypeStruct((n_pad, f_out_pad), out_dtype),
        grid_spec=pltpu.PrefetchScalarGridSpec(
            num_scalar_prefetch=2,
            grid=(n_r, n_k),
            in_specs=[
                # adjacency block, data-dependent column index (sparse skip).
                pl.BlockSpec((tm, tk), lambda i, k, nb, cb: (i, cb[i, k])),
                # source-node feature block streamed over the contraction axis.
                pl.BlockSpec((tk, f_in_pad), lambda i, k, nb, cb: (cb[i, k], 0)),
                # row tile of x for the self/root term (constant over k).
                pl.BlockSpec((tm, f_in_pad), lambda i, k, nb, cb: (i, 0)),
                # per-row inverse degree (f32 epilogue scale).
                pl.BlockSpec((tm, 1), lambda i, k, nb, cb: (i, 0)),
                # weights + bias: resident (constant index map).
                pl.BlockSpec((f_in_pad, f_out_pad), lambda i, k, nb, cb: (0, 0)),
                pl.BlockSpec((f_in_pad, f_out_pad), lambda i, k, nb, cb: (0, 0)),
                pl.BlockSpec((1, f_out_pad), lambda i, k, nb, cb: (0, 0)),
            ],
            out_specs=pl.BlockSpec((tm, f_out_pad), lambda i, k, nb, cb: (i, 0)),
            scratch_shapes=[pltpu.VMEM((tm, f_in_pad), jnp.float32)],
        ),
        compiler_params=pltpu.CompilerParams(
            dimension_semantics=("parallel", "arbitrary"),  # rows megacore-shardable
            vmem_limit_bytes=vmem_limit),
        cost_estimate=pl.CostEstimate(flops=int(flops), transcendentals=0,
                                      bytes_accessed=int(bytes_accessed)),
    )(nblk, cols, adj, x, x, inv_deg, wl_t, wr_t, bias2d)


# --------------------------------------------------------------------------
# Glue (plain JAX, runs once): adjacency densification, schedules, params.
# --------------------------------------------------------------------------
def init_sage_params(key, in_channels, hidden_channels, out_channels, num_layers):
    """Deterministic synthetic weights, same shapes as the PyTorch module."""
    dims = [in_channels] + [hidden_channels] * (num_layers - 1) + [out_channels]
    params = []
    for layer in range(num_layers):
        f_in, f_out = dims[layer], dims[layer + 1]
        key, k1, k2, k3 = jax.random.split(key, 4)
        scale = 1.0 / jnp.sqrt(jnp.float32(f_in))
        w_l = jax.random.uniform(k1, (f_out, f_in), jnp.float32, -scale, scale)
        w_r = jax.random.uniform(k2, (f_out, f_in), jnp.float32, -scale, scale)
        b = jax.random.uniform(k3, (f_out,), jnp.float32, -scale, scale)
        params.append((w_l, w_r, b))
    return params


def prepare_sage_params(params):
    """Pad to 128 lanes, transpose, cast to bf16 — ONCE, outside the hot path."""
    prepped = []
    for w_l, w_r, b in params:
        f_out, f_in = w_l.shape
        f_in_pad = _round_up(f_in, 128)
        f_out_pad = _round_up(f_out, 128)
        wl_t = (jnp.zeros((f_in_pad, f_out_pad), jnp.float32)
                .at[:f_in, :f_out].set(jnp.transpose(w_l)).astype(jnp.bfloat16))
        wr_t = (jnp.zeros((f_in_pad, f_out_pad), jnp.float32)
                .at[:f_in, :f_out].set(jnp.transpose(w_r)).astype(jnp.bfloat16))
        b2d = jnp.zeros((1, f_out_pad), jnp.float32).at[0, :f_out].set(b)
        prepped.append((wl_t, wr_t, b2d, f_in, f_out))
    return prepped


def pad_graph_inputs(x, edge_index, num_nodes, *, block_rows=256, block_k=512):
    """Densify edge_index into int8 edge counts + f32 inverse in-degree, pad, cast."""
    n, f_in = x.shape
    tile = max(block_rows, block_k, 128)
    n_pad = _round_up(n, tile)
    f_in_pad = _round_up(f_in, 128)

    src = edge_index[0]
    dst = edge_index[1]
    counts = jnp.zeros((n, n), jnp.float32).at[dst, src].add(1.0)   # src -> dst
    deg = jnp.sum(counts, axis=1, keepdims=True)                    # in-degree
    inv_deg = jnp.where(deg > 0, 1.0 / jnp.maximum(deg, 1.0), 0.0)  # mean; 0 if isolated

    # int8 edge counts (assumes < 128 parallel edges per pair — true for real graphs).
    adj_p = (jnp.zeros((n_pad, n_pad), jnp.int8)
             .at[:n, :n].set(counts.astype(jnp.int8)))
    inv_deg_p = jnp.zeros((n_pad, 1), jnp.float32).at[:n, :].set(inv_deg)
    x_p = (jnp.zeros((n_pad, f_in_pad), jnp.float32)
           .at[:n, :f_in].set(x).astype(jnp.bfloat16))
    return adj_p, inv_deg_p, x_p


def build_block_schedule(adj_p, tm, tk):
    """Per row tile: count + compacted list of non-empty adjacency column blocks.

    Padding entries repeat the last valid block index so Pallas skips their DMA.
    """
    n_pad = adj_p.shape[0]
    n_r, n_k = n_pad // tm, n_pad // tk
    blk = (adj_p.astype(jnp.int32).reshape(n_r, tm, n_k, tk).sum(axis=(1, 3)) > 0)
    nblk = blk.sum(axis=1).astype(jnp.int32)                           # (n_r,)
    order = jnp.argsort(jnp.logical_not(blk), axis=1, stable=True).astype(jnp.int32)
    last = jnp.take_along_axis(order, jnp.maximum(nblk - 1, 0)[:, None], axis=1)
    k_idx = jnp.arange(n_k, dtype=jnp.int32)[None, :]
    cols = jnp.where(k_idx < nblk[:, None], order, last).astype(jnp.int32)
    return nblk, cols


def graphsage_forward(prepped_params, adj_p, inv_deg_p, x_p, nblk, cols, n, *,
                      block_rows=256, block_k=512):
    """Mirrors GraphSAGE.forward: (conv -> relu -> dropout) x (L-1), then conv."""
    h = x_p
    num_layers = len(prepped_params)
    for layer, (wl_t, wr_t, b2d, _fi, _fo) in enumerate(prepped_params):
        is_last = layer == num_layers - 1
        h = sage_conv_layer(
            adj_p, h, inv_deg_p, nblk, cols, wl_t, wr_t, b2d,
            apply_relu=not is_last,
            out_dtype=jnp.float32 if is_last else jnp.bfloat16,
            block_rows=block_rows, block_k=block_k)
        # F.dropout with training=False is identity (eval mode).
    f_out_last = prepped_params[-1][4]
    return h[:n, :f_out_last]


# --------------------------------------------------------------------------
# References.
# --------------------------------------------------------------------------
def _reference_forward_quantized(prepped_params, adj_p, inv_deg_p, x_p, n):
    """Pure-JAX reference replicating the kernel's bf16/int8 quantization."""
    adj_bf16 = adj_p.astype(jnp.bfloat16)
    h = x_p
    num_layers = len(prepped_params)
    for layer, (wl_t, wr_t, b2d, _fi, _fo) in enumerate(prepped_params):
        is_last = layer == num_layers - 1
        aggr = jnp.dot(adj_bf16, h, preferred_element_type=jnp.float32) * inv_deg_p
        out = jnp.dot(aggr.astype(jnp.bfloat16), wl_t,
                      preferred_element_type=jnp.float32)
        out = out + jnp.dot(h, wr_t, preferred_element_type=jnp.float32) + b2d
        if not is_last:
            out = jnp.maximum(out, 0.0)
        h = out.astype(jnp.float32 if is_last else jnp.bfloat16)
    f_out_last = prepped_params[-1][4]
    return h[:n, :f_out_last]


def _reference_forward_f32(params, x, edge_index, n):
    """Full-f32 PyG SAGEConv(mean) semantics — catches quantization drift."""
    src, dst = edge_index[0], edge_index[1]
    adj = jnp.zeros((n, n), jnp.float32).at[dst, src].add(1.0)
    deg = jnp.sum(adj, axis=1, keepdims=True)
    adj = adj / jnp.maximum(deg, 1.0)
    h = x
    num_layers = len(params)
    for layer, (w_l, w_r, b) in enumerate(params):
        aggr = adj @ h
        out = aggr @ w_l.T + h @ w_r.T + b
        if layer != num_layers - 1:
            out = jnp.maximum(out, 0.0)
        h = out
    return h


if __name__ == "__main__":
    key = jax.random.PRNGKey(0)

    # Small, deterministic problem.  Sources restricted to the first 256 nodes so
    # one adjacency column block is empty -> exercises the block-sparse skip path;
    # the 3x3 block grid also exercises multi-step K accumulation.
    num_nodes = 384
    num_edges = 1024
    in_channels = 32
    hidden_channels = 64
    out_channels = 32
    num_layers = 3
    dropout = 0.5          # eval mode -> identity
    block_rows = 128       # small-test tiles; use 256 on v6e/v7x at real sizes
    block_k = 128

    key, kx, ke_src, ke_dst = jax.random.split(key, 4)
    x = jax.random.normal(kx, (num_nodes, in_channels), dtype=jnp.float32)
    src = jax.random.randint(ke_src, (num_edges,), 0, 256, dtype=jnp.int32)
    dst = jax.random.randint(ke_dst, (num_edges,), 0, num_nodes, dtype=jnp.int32)
    edge_index = jnp.stack([src, dst], axis=0)  # [2, E]

    params = init_sage_params(
        key, in_channels, hidden_channels, out_channels, num_layers)
    prepped = prepare_sage_params(params)
    adj_p, inv_deg_p, x_p = pad_graph_inputs(
        x, edge_index, num_nodes, block_rows=block_rows, block_k=block_k)

    n_pad = adj_p.shape[0]
    tm = min(block_rows, n_pad)
    tk = min(block_k, n_pad)
    nblk, cols = build_block_schedule(adj_p, tm, tk)

    out = graphsage_forward(prepped, adj_p, inv_deg_p, x_p, nblk, cols, num_nodes,
                            block_rows=block_rows, block_k=block_k)
    out = jax.block_until_ready(out)

    assert out.shape == (num_nodes, out_channels)
    assert jnp.all(jnp.isfinite(out))

    # (1) Mirror reference (same quantization) — tight tolerance.
    ref_q = jax.block_until_ready(
        _reference_forward_quantized(prepped, adj_p, inv_deg_p, x_p, num_nodes))
    err_q = jnp.max(jnp.abs(out - ref_q)) / (jnp.max(jnp.abs(ref_q)) + 1e-6)
    assert err_q < 2e-2, f"kernel/quantized-ref mismatch, rel err = {err_q}"

    # (2) Full-f32 PyG-semantics reference — looser tolerance (bf16 matmuls).
    ref_f = jax.block_until_ready(
        _reference_forward_f32(params, x, edge_index, num_nodes))
    err_f = jnp.max(jnp.abs(out - ref_f)) / (jnp.max(jnp.abs(ref_f)) + 1e-6)
    assert err_f < 5e-2, f"kernel/f32-ref mismatch, rel err = {err_f}"

    print("KERNEL_OK")
</pallas_src>

<mosaic_0001>
module attributes {stable_mosaic.version = 11 : i64} {
  func.func @_sage_layer_kernel(%arg0: i32, %arg1: i32, %arg2: memref<3xi32, #tpu.memory_space<smem>>, %arg3: memref<3x3xi32, #tpu.memory_space<smem>>, %arg4: memref<128x128xi8, #tpu.memory_space<vmem>>, %arg5: memref<128x128xbf16, #tpu.memory_space<vmem>>, %arg6: memref<128x128xbf16, #tpu.memory_space<vmem>>, %arg7: memref<128x1xf32, #tpu.memory_space<vmem>>, %arg8: memref<128x128xbf16, #tpu.memory_space<vmem>>, %arg9: memref<128x128xbf16, #tpu.memory_space<vmem>>, %arg10: memref<1x128xf32, #tpu.memory_space<vmem>>, %arg11: memref<128x128xbf16, #tpu.memory_space<vmem>>, %arg12: memref<128x128xf32, #tpu.memory_space<vmem>>) attributes {dimension_semantics = [#tpu.dimension_semantics<parallel>, #tpu.dimension_semantics<arbitrary>], iteration_bounds = array<i64: 3, 3>, scalar_prefetch = 2 : i64, scratch_operands = 1 : i64, tpu.core_type = #tpu.core_type<tc>, window_params = [{transform_indices = @transform_0, window_bounds = array<i64: 128, 128>}, {transform_indices = @transform_1, window_bounds = array<i64: 128, 128>}, {transform_indices = @transform_2, window_bounds = array<i64: 128, 128>}, {transform_indices = @transform_3, window_bounds = array<i64: 128, 1>}, {pipeline_mode = #tpu.pipeline_mode<synchronous>, transform_indices = @transform_4, window_bounds = array<i64: 128, 128>}, {pipeline_mode = #tpu.pipeline_mode<synchronous>, transform_indices = @transform_5, window_bounds = array<i64: 128, 128>}, {pipeline_mode = #tpu.pipeline_mode<synchronous>, transform_indices = @transform_6, window_bounds = array<i64: 1, 128>}, {transform_indices = @transform_7, window_bounds = array<i64: 128, 128>}]} {
    %c0_i32 = arith.constant 0 : i32
    %0 = arith.cmpi eq, %arg1, %c0_i32 : i32
    %1 = arith.extui %0 : i1 to i32
    %c0_i32_0 = arith.constant 0 : i32
    %2 = arith.cmpi ne, %1, %c0_i32_0 : i32
    scf.if %2 {
      %cst = arith.constant 0.000000e+00 : f32
      %11 = vector.broadcast %cst : f32 to vector<128x128xf32>
      %c0 = arith.constant 0 : index
      %c0_3 = arith.constant 0 : index
      %12 = vector.load %arg12[%c0, %c0_3] : memref<128x128xf32, #tpu.memory_space<vmem>>, vector<128x128xf32>
      tpu.vector_store %arg12[%c0, %c0_3], %11 {strides = array<i32>} : memref<128x128xf32, #tpu.memory_space<vmem>>, vector<128x128xf32>,
    } else {
    }
    %3 = arith.index_cast %arg0 : i32 to index
    %4 = memref.load %arg2[%3] : memref<3xi32, #tpu.memory_space<smem>>
    %5 = arith.cmpi slt, %arg1, %4 : i32
    %6 = arith.extui %5 : i1 to i32
    %c0_i32_1 = arith.constant 0 : i32
    %7 = arith.cmpi ne, %6, %c0_i32_1 : i32
    scf.if %7 {
      %c0 = arith.constant 0 : index
      %c0_3 = arith.constant 0 : index
      %11 = vector.load %arg4[%c0, %c0_3] : memref<128x128xi8, #tpu.memory_space<vmem>>, vector<128x128xi8>
      %12 = arith.sitofp %11 : vector<128x128xi8> to vector<128x128xbf16>
      %c0_4 = arith.constant 0 : index
      %c0_5 = arith.constant 0 : index
      %13 = vector.load %arg12[%c0_4, %c0_5] : memref<128x128xf32, #tpu.memory_space<vmem>>, vector<128x128xf32>
      %c0_6 = arith.constant 0 : index
      %c0_7 = arith.constant 0 : index
      %14 = vector.load %arg5[%c0_6, %c0_7] : memref<128x128xbf16, #tpu.memory_space<vmem>>, vector<128x128xbf16>
      %cst = arith.constant dense<0.000000e+00> : vector<128x128xf32>
      %15 = tpu.matmul %12, %14, %cst {dimension_numbers = #tpu.dot_dimension_numbers<[1], [0], [0], [1], [0, 0, 1, 1], [], []>} : vector<128x128xbf16>, vector<128x128xbf16>, vector<128x128xf32> -> vector<128x128xf32>
      %16 = arith.addf %13, %15 : vector<128x128xf32>
      %c0_8 = arith.constant 0 : index
      %c0_9 = arith.constant 0 : index
      %17 = vector.load %arg12[%c0_8, %c0_9] : memref<128x128xf32, #tpu.memory_space<vmem>>, vector<128x128xf32>
      tpu.vector_store %arg12[%c0_8, %c0_9], %16 {strides = array<i32>} : memref<128x128xf32, #tpu.memory_space<vmem>>, vector<128x128xf32>,
    } else {
    }
    %c2_i32 = arith.constant 2 : i32
    %8 = arith.cmpi eq, %arg1, %c2_i32 : i32
    %9 = arith.extui %8 : i1 to i32
    %c0_i32_2 = arith.constant 0 : i32
    %10 = arith.cmpi ne, %9, %c0_i32_2 : i32
    scf.if %10 {
      %c0 = arith.constant 0 : index
      %c0_3 = arith.constant 0 : index
      %11 = vector.load %arg12[%c0, %c0_3] : memref<128x128xf32, #tpu.memory_space<vmem>>, vector<128x128xf32>
      %c0_4 = arith.constant 0 : index
      %c0_5 = arith.constant 0 : index
      %12 = vector.load %arg7[%c0_4, %c0_5] : memref<128x1xf32, #tpu.memory_space<vmem>>, vector<128x1xf32>
      %13 = vector.broadcast %12 : vector<128x1xf32> to vector<128x128xf32>
      %14 = arith.mulf %11, %13 : vector<128x128xf32>
      %15 = arith.truncf %14 : vector<128x128xf32> to vector<128x128xbf16>
      %c0_6 = arith.constant 0 : index
      %c0_7 = arith.constant 0 : index
      %16 = vector.load %arg8[%c0_6, %c0_7] : memref<128x128xbf16, #tpu.memory_space<vmem>>, vector<128x128xbf16>
      %cst = arith.constant dense<0.000000e+00> : vector<128x128xf32>
      %17 = tpu.matmul %15, %16, %cst {dimension_numbers = #tpu.dot_dimension_numbers<[1], [0], [0], [1], [0, 0, 1, 1], [], []>} : vector<128x128xbf16>, vector<128x128xbf16>, vector<128x128xf32> -> vector<128x128xf32>
      %c0_8 = arith.constant 0 : index
      %c0_9 = arith.constant 0 : index
      %18 = vector.load %arg6[%c0_8, %c0_9] : memref<128x128xbf16, #tpu.memory_space<vmem>>, vector<128x128xbf16>
      %c0_10 = arith.constant 0 : index
      %c0_11 = arith.constant 0 : index
      %19 = vector.load %arg9[%c0_10, %c0_11] : memref<128x128xbf16, #tpu.memory_space<vmem>>, vector<128x128xbf16>
      %cst_12 = arith.constant dense<0.000000e+00> : vector<128x128xf32>
      %20 = tpu.matmul %18, %19, %cst_12 {dimension_numbers = #tpu.dot_dimension_numbers<[1], [0], [0], [1], [0, 0, 1, 1], [], []>} : vector<128x128xbf16>, vector<128x128xbf16>, vector<128x128xf32> -> vector<128x128xf32>
      %21 = arith.addf %17, %20 : vector<128x128xf32>
      %c0_13 = arith.constant 0 : index
      %c0_14 = arith.constant 0 : index
      %22 = vector.load %arg10[%c0_13, %c0_14] : memref<1x128xf32, #tpu.memory_space<vmem>>, vector<1x128xf32>
      %23 = vector.broadcast %22 : vector<1x128xf32> to vector<128x128xf32>
      %24 = arith.addf %21, %23 : vector<128x128xf32>
      %cst_15 = arith.constant 0.000000e+00 : f32
      %25 = vector.broadcast %cst_15 : f32 to vector<128x128xf32>
      %26 = arith.maximumf %24, %25 : vector<128x128xf32>
      %27 = arith.truncf %26 : vector<128x128xf32> to vector<128x128xbf16>
      %c0_16 = arith.constant 0 : index
      %c0_17 = arith.constant 0 : index
      %28 = vector.load %arg11[%c0_16, %c0_17] : memref<128x128xbf16, #tpu.memory_space<vmem>>, vector<128x128xbf16>
      tpu.vector_store %arg11[%c0_16, %c0_17], %27 {strides = array<i32>} : memref<128x128xbf16, #tpu.memory_space<vmem>>, vector<128x128xbf16>,
    } else {
    }
    return
  }
  func.func @transform_0(%arg0: i32, %arg1: i32, %arg2: memref<3xi32, #tpu.memory_space<smem>>, %arg3: memref<3x3xi32, #tpu.memory_space<smem>>) -> (i32, i32) {
    %0 = arith.index_cast %arg0 : i32 to index
    %1 = arith.index_cast %arg1 : i32 to index
    %2 = memref.load %arg3[%0, %1] : memref<3x3xi32, #tpu.memory_space<smem>>
    %c0_i32 = arith.constant 0 : i32
    return %arg0, %2 : i32, i32
  }
  func.func @transform_1(%arg0: i32, %arg1: i32, %arg2: memref<3xi32, #tpu.memory_space<smem>>, %arg3: memref<3x3xi32, #tpu.memory_space<smem>>) -> (i32, i32) {
    %0 = arith.index_cast %arg0 : i32 to index
    %1 = arith.index_cast %arg1 : i32 to index
    %2 = memref.load %arg3[%0, %1] : memref<3x3xi32, #tpu.memory_space<smem>>
    %c0_i32 = arith.constant 0 : i32
    %c0_i32_0 = arith.constant 0 : i32
    return %2, %c0_i32 : i32, i32
  }
  func.func @transform_2(%arg0: i32, %arg1: i32, %arg2: memref<3xi32, #tpu.memory_space<smem>>, %arg3: memref<3x3xi32, #tpu.memory_space<smem>>) -> (i32, i32) {
    %c0_i32 = arith.constant 0 : i32
    %c0_i32_0 = arith.constant 0 : i32
    return %arg0, %c0_i32 : i32, i32
  }
  func.func @transform_3(%arg0: i32, %arg1: i32, %arg2: memref<3xi32, #tpu.memory_space<smem>>, %arg3: memref<3x3xi32, #tpu.memory_space<smem>>) -> (i32, i32) {
    %c0_i32 = arith.constant 0 : i32
    %c0_i32_0 = arith.constant 0 : i32
    return %arg0, %c0_i32 : i32, i32
  }
  func.func @transform_4(%arg0: i32, %arg1: i32, %arg2: memref<3xi32, #tpu.memory_space<smem>>, %arg3: memref<3x3xi32, #tpu.memory_space<smem>>) -> (i32, i32) {
    %c0_i32 = arith.constant 0 : i32
    %c0_i32_0 = arith.constant 0 : i32
    %c0_i32_1 = arith.constant 0 : i32
    return %c0_i32, %c0_i32_0 : i32, i32
  }
  func.func @transform_5(%arg0: i32, %arg1: i32, %arg2: memref<3xi32, #tpu.memory_space<smem>>, %arg3: memref<3x3xi32, #tpu.memory_space<smem>>) -> (i32, i32) {
    %c0_i32 = arith.constant 0 : i32
    %c0_i32_0 = arith.constant 0 : i32
    %c0_i32_1 = arith.constant 0 : i32
    return %c0_i32, %c0_i32_0 : i32, i32
  }
  func.func @transform_6(%arg0: i32, %arg1: i32, %arg2: memref<3xi32, #tpu.memory_space<smem>>, %arg3: memref<3x3xi32, #tpu.memory_space<smem>>) -> (i32, i32) {
    %c0_i32 = arith.constant 0 : i32
    %c0_i32_0 = arith.constant 0 : i32
    %c0_i32_1 = arith.constant 0 : i32
    return %c0_i32, %c0_i32_0 : i32, i32
  }
  func.func @transform_7(%arg0: i32, %arg1: i32, %arg2: memref<3xi32, #tpu.memory_space<smem>>, %arg3: memref<3x3xi32, #tpu.memory_space<smem>>) -> (i32, i32) {
    %c0_i32 = arith.constant 0 : i32
    %c0_i32_0 = arith.constant 0 : i32
    return %arg0, %c0_i32 : i32, i32
  }
}

</mosaic_0001>

<llo_original>
// kernel: tpu_custom_call.1
$region0: #{tpu_custom_call.1}
  #allocation0 [shape = 'u32[]', space=smem, size = 0x4, offset = 0x4, fixed_abs, tag = 'smem constant byte address 0x4 - core index']
  #allocation1 [shape = 'u32[144,128]{1,0:T(1,128)}', space=vmem, size = 0x12000, scoped, tag = 'internal scratch']
  #allocation2 [shape = 'f32[128,128]{1,0:T(8,128)}', space=vmem, size = 0x10000, scoped, tag = 'scratch operand']
  #allocation3 [shape = 's32[1]{0}', space=sflag, size = 0x4, scoped, tag = 'scoped memory for tpu_custom_call.1']
  #allocation4 [shape = 'u8[512]{0}', space=smem, size = 0x200, scoped, tag = 'prefetched SMEM operand 0']
  #allocation5 [shape = 'u8[2048]{0}', space=smem, size = 0x800, scoped, tag = 'prefetched SMEM operand 1']
  %s0 = inlined_call_operand.vmem [shape: s32[3], index: 0, kind: input, shape index: {}]
  %s1 = inlined_call_operand.vmem [shape: s32[3,3], index: 1, kind: input, shape index: {}]
  %s2 = inlined_call_operand.vmem [shape: s8[384,384], index: 2, kind: input, shape index: {}]
  %s3 = inlined_call_operand.hbm [shape: bf16[384,128], index: 3, kind: input, shape index: {}]
  %s4 = inlined_call_operand.hbm [shape: bf16[384,128], index: 4, kind: input, shape index: {}]
  %s5 = inlined_call_operand.vmem [shape: f32[384,1], index: 5, kind: input, shape index: {}]
  %s6 = inlined_call_operand.vmem [shape: bf16[128,128], index: 6, kind: input, shape index: {}]
  %s7 = inlined_call_operand.hbm [shape: bf16[128,128], index: 7, kind: input, shape index: {}]
  %s8 = inlined_call_operand.vmem [shape: f32[1,128], index: 8, kind: input, shape index: {}]
  %s9 = inlined_call_operand.hbm [shape: bf16[384,128], index: 9, kind: output, shape index: {}]
  %s10 = sld [smem:[#allocation0]]
  $region123: #{tpu_custom_call.1} parent=0
    _
  %s12 = ssub.s32 1, %s10
  %s13 = scalar_select 0, %s12, %s10
  %s14 = sshll.u32 %s0, 4
  %s15 = int_to_ptr.vmem [resolvable:$true] %s14
  %17 = dma.vmem_to_smem %s15, 16, [#allocation4], [#allocation3]
  %s18 = sshll.u32 %s1, 4
  %s19 = int_to_ptr.vmem [resolvable:$true] %s18
  %21 = dma.vmem_to_smem %s19, 64, [#allocation5], [#allocation3]
  %22 = dma.done [#allocation3], 80
  %23 = sfence
  $region1: #{tpu_custom_call.1} parent=0
    #allocation6 [shape = 'u8[32768]{0}', space=vmem, size = 0x8000, scoped, tag = 'input window, operand 2']
    #allocation7 [shape = 'u8[65536]{0}', space=vmem, size = 0x10000, scoped, tag = 'input window, operand 3']
    #allocation8 [shape = 's32[2]{0}', space=sflag, size = 0x8, scoped, tag = 'scoped memory for tpu_custom_call.1']
    #allocation9 [shape = 's32[2]{0}', space=sflag, size = 0x8, scoped, tag = 'scoped memory for tpu_custom_call.1']
    #allocation10 [shape = 'u8[65536]{0}', space=vmem, size = 0x10000, scoped, tag = 'input window, operand 4']
    #allocation11 [shape = 's32[2]{0}', space=sflag, size = 0x8, scoped, tag = 'scoped memory for tpu_custom_call.1']
    #allocation12 [shape = 'u8[32768]{0}', space=vmem, size = 0x8000, scoped, tag = 'input window, operand 7, single buffered']
    #allocation13 [shape = 'u8[65536]{0}', space=vmem, size = 0x10000, scoped, tag = 'output window, operand 0']
    %24 = vsyncpa [#allocation8], 0
    %s25 = scalar_lea.sflag [#allocation8], 1
    %26 = vsyncpa %s25, 0
    %27 = vsyncpa [#allocation11], 0
    %s28 = scalar_lea.sflag [#allocation11], 1
    %29 = vsyncpa %s28, 0
    %30 = vsyncpa [#allocation9], 0
    %s31 = scalar_lea.sflag [#allocation9], 1
    %32 = vsyncpa %s31, 0
    loop: start=0, step=1, limit=11
    $region2: #{tpu_custom_call.1} parent=1 // loop_pre_header
      _
    $region3: #{tpu_custom_call.1} parent=1 // loop_header
      %s34 = sphi 0, %s38
      %p35 = scmp.ge.s32.totalorder %s34, 11
      %s41 = sphi 0, %s53
      %s42 = sphi 0, %s49
      %s43 = sphi 0, %s41
      %s44 = sphi 0, %s42
      %s45 = sphi 0, %s43
      %s46 = sphi 0, %s44
      %s74 = sphi 0, %s76
      %s77 = sphi 0, %s74
      %s78 = sphi 0, %s77
      %s94 = sphi 0, %s78
      %s116 = sphi 0, %s118
      %s119 = sphi 0, %s116
      %s120 = sphi 0, %s119
      %s136 = sphi 0, %s120
      %s142 = sphi 0, %s144
      %s145 = sphi 0, %s142
      %s146 = sphi 0, %s145
      %s162 = sphi 0, %s146
      %s168 = sphi 0, %s170
      %s171 = sphi 0, %s168
      %s172 = sphi 0, %s171
      %s188 = sphi 0, %s172
      %s192 = sphi 0, %s192
      %s194 = sphi 0, %s192
      %s195 = sphi 0, %s194
      %s209 = sphi 0, %s195
      %s213 = sphi 0, %s213
      %s215 = sphi 0, %s213
      %s216 = sphi 0, %s215
      %s230 = sphi 0, %s216
      %s234 = sphi 0, %s234
      %s236 = sphi 0, %s234
      %s237 = sphi 0, %s236
      %s251 = sphi 0, %s237
      %s257 = sphi 0, %s259
      %s260 = sphi 0, %s257
      %s261 = sphi 0, %s260
      %s277 = sphi 0, %s261
    $region4: #{tpu_custom_call.1} parent=1 // loop_header_branch
      %37 = sbr.rel (%p35) target = $region8
    $region5: #{tpu_custom_call.1} parent=1 // loop_body
      %s39 = ssub.s32 %s34, 1
      %s40 = ssub.s32 %s34, 2
      %s47 = sadd.s32 1, %s42
      %p48 = scmp.ge.s32.totalorder %s47, 3
      %s49 = scalar_select %p48, 0, %s47
      %s50 = sadd.s32 1, %s41
      %s51 = scalar_select %p48, %s50, %s41
      %p52 = scmp.ge.s32.totalorder %s51, 3
      %s53 = scalar_select %p52, 0, %s51
      %s54 = sshra.s32 %s42, 7
      %s55 = sand.u32 %s42, 127
      %s56 = sadd.s32 %s54, %s41
      %s57 = smul.u32 %s56, 128
      %s58 = sshra.s32 %s42, 7
      %s59 = sand.u32 %s42, 127
      %s60 = sadd.s32 %s57, %s59
      %s61 = sld [smem:[#allocation5 + %s60]]
      %s62 = sshra.s32 %s49, 7
      %s63 = sand.u32 %s49, 127
      %s64 = sadd.s32 %s62, %s53
      %s65 = smul.u32 %s64, 128
      %s66 = sshra.s32 %s49, 7
      %s67 = sand.u32 %s49, 127
      %s68 = sadd.s32 %s65, %s67
      %s69 = sld [smem:[#allocation5 + %s68]]
      %s70 = ssub.s32 %s41, %s53
      %s71 = ssub.s32 %s61, %s69
      %s72 = sor.u32 %s70, %s71
      %p73 = scmp.eq.s32.totalorder %s72, 0
      %s75 = sadd.s32 %s74, 1
      %s76 = scalar_select %p73, %s74, %s75
      %p79 = pneg %p73
      %p80 = scmp.eq.s32.totalorder %s34, 8
      %p81 = por %p79, %p80
      %p82 = scmp.ne.s32.totalorder %s74, %s77
      %p83 = scmp.eq.s32.totalorder %s34, 0
      %p84 = por %p82, %p83
      %p85 = scmp.ne.s32.totalorder %s74, %s77
      %p86 = scmp.eq.s32.totalorder %s39, 8
      %p87 = por %p85, %p86
      %p88 = scmp.ne.s32.totalorder %s77, %s78
      %p89 = scmp.eq.s32.totalorder %s39, 0
      %p90 = por %p88, %p89
      %p91 = scmp.ne.s32.totalorder %s77, %s78
      %p92 = scmp.eq.s32.totalorder %s40, 8
      %p93 = por %p91, %p92
      %p95 = scmp.ne.s32.totalorder %s78, %s94
      %p96 = scmp.eq.s32.totalorder %s40, 0
      %p97 = por %p95, %p96
      %s98 = sshra.s32 %s42, 7
      %s99 = sand.u32 %s42, 127
      %s100 = sadd.s32 %s98, %s41
      %s101 = smul.u32 %s100, 128
      %s102 = sshra.s32 %s42, 7
      %s103 = sand.u32 %s42, 127
      %s104 = sadd.s32 %s101, %s103
      %s105 = sld [smem:[#allocation5 + %s104]]
      %s106 = sshra.s32 %s49, 7
      %s107 = sand.u32 %s49, 127
      %s108 = sadd.s32 %s106, %s53
      %s109 = smul.u32 %s108, 128
      %s110 = sshra.s32 %s49, 7
      %s111 = sand.u32 %s49, 127
      %s112 = sadd.s32 %s109, %s111
      %s113 = sld [smem:[#allocation5 + %s112]]
      %s114 = ssub.s32 %s105, %s113
      %p115 = scmp.eq.s32.totalorder %s114, 0
      %s117 = sadd.s32 %s116, 1
      %s118 = scalar_select %p115, %s116, %s117
      %p121 = pneg %p115
      %p122 = scmp.eq.s32.totalorder %s34, 8
      %p123 = por %p121, %p122
      %p124 = scmp.ne.s32.totalorder %s116, %s119
      %p125 = scmp.eq.s32.totalorder %s34, 0
      %p126 = por %p124, %p125
      %p127 = scmp.ne.s32.totalorder %s116, %s119
      %p128 = scmp.eq.s32.totalorder %s39, 8
      %p129 = por %p127, %p128
      %p130 = scmp.ne.s32.totalorder %s119, %s120
      %p131 = scmp.eq.s32.totalorder %s39, 0
      %p132 = por %p130, %p131
      %p133 = scmp.ne.s32.totalorder %s119, %s120
      %p134 = scmp.eq.s32.totalorder %s40, 8
      %p135 = por %p133, %p134
      %p137 = scmp.ne.s32.totalorder %s120, %s136
      %p138 = scmp.eq.s32.totalorder %s40, 0
      %p139 = por %p137, %p138
      %s140 = ssub.s32 %s41, %s53
      %p141 = scmp.eq.s32.totalorder %s140, 0
      %s143 = sadd.s32 %s142, 1
      %s144 = scalar_select %p141, %s142, %s143
      %p147 = pneg %p141
      %p148 = scmp.eq.s32.totalorder %s34, 8
      %p149 = por %p147, %p148
      %p150 = scmp.ne.s32.totalorder %s142, %s145
      %p151 = scmp.eq.s32.totalorder %s34, 0
      %p152 = por %p150, %p151
      %p153 = scmp.ne.s32.totalorder %s142, %s145
      %p154 = scmp.eq.s32.totalorder %s39, 8
      %p155 = por %p153, %p154
      %p156 = scmp.ne.s32.totalorder %s145, %s146
      %p157 = scmp.eq.s32.totalorder %s39, 0
      %p158 = por %p156, %p157
      %p159 = scmp.ne.s32.totalorder %s145, %s146
      %p160 = scmp.eq.s32.totalorder %s40, 8
      %p161 = por %p159, %p160
      %p163 = scmp.ne.s32.totalorder %s146, %s162
      %p164 = scmp.eq.s32.totalorder %s40, 0
      %p165 = por %p163, %p164
      %s166 = ssub.s32 %s41, %s53
      %p167 = scmp.eq.s32.totalorder %s166, 0
      %s169 = sadd.s32 %s168, 1
      %s170 = scalar_select %p167, %s168, %s169
      %p173 = pneg %p167
      %p174 = scmp.eq.s32.totalorder %s34, 8
      %p175 = por %p173, %p174
      %p176 = scmp.ne.s32.totalorder %s168, %s171
      %p177 = scmp.eq.s32.totalorder %s34, 0
      %p178 = por %p176, %p177
      %p179 = scmp.ne.s32.totalorder %s168, %s171
      %p180 = scmp.eq.s32.totalorder %s39, 8
      %p181 = por %p179, %p180
      %p182 = scmp.ne.s32.totalorder %s171, %s172
      %p183 = scmp.eq.s32.totalorder %s39, 0
      %p184 = por %p182, %p183
      %p185 = scmp.ne.s32.totalorder %s171, %s172
      %p186 = scmp.eq.s32.totalorder %s40, 8
      %p187 = por %p185, %p186
      %p189 = scmp.ne.s32.totalorder %s172, %s188
      %p190 = scmp.eq.s32.totalorder %s40, 0
      %p191 = por %p189, %p190
      %s193 = sadd.s32 %s192, 1
      %p196 = scmp.eq.s32.totalorder %s34, 8
      %p197 = scmp.ne.s32.totalorder %s192, %s194
      %p198 = scmp.eq.s32.totalorder %s34, 0
      %p199 = por %p197, %p198
      %p200 = scmp.ne.s32.totalorder %s192, %s194
      %p201 = scmp.eq.s32.totalorder %s39, 8
      %p202 = por %p200, %p201
      %p203 = scmp.ne.s32.totalorder %s194, %s195
      %p204 = scmp.eq.s32.totalorder %s39, 0
      %p205 = por %p203, %p204
      %p206 = scmp.ne.s32.totalorder %s194, %s195
      %p207 = scmp.eq.s32.totalorder %s40, 8
      %p208 = por %p206, %p207
      %p210 = scmp.ne.s32.totalorder %s195, %s209
      %p211 = scmp.eq.s32.totalorder %s40, 0
      %p212 = por %p210, %p211
      %s214 = sadd.s32 %s213, 1
      %p217 = scmp.eq.s32.totalorder %s34, 8
      %p218 = scmp.ne.s32.totalorder %s213, %s215
      %p219 = scmp.eq.s32.totalorder %s34, 0
      %p220 = por %p218, %p219
      %p221 = scmp.ne.s32.totalorder %s213, %s215
      %p222 = scmp.eq.s32.totalorder %s39, 8
      %p223 = por %p221, %p222
      %p224 = scmp.ne.s32.totalorder %s215, %s216
      %p225 = scmp.eq.s32.totalorder %s39, 0
      %p226 = por %p224, %p225
      %p227 = scmp.ne.s32.totalorder %s215, %s216
      %p228 = scmp.eq.s32.totalorder %s40, 8
      %p229 = por %p227, %p228
      %p231 = scmp.ne.s32.totalorder %s216, %s230
      %p232 = scmp.eq.s32.totalorder %s40, 0
      %p233 = por %p231, %p232
      %s235 = sadd.s32 %s234, 1
      %p238 = scmp.eq.s32.totalorder %s34, 8
      %p239 = scmp.ne.s32.totalorder %s234, %s236
      %p240 = scmp.eq.s32.totalorder %s34, 0
      %p241 = por %p239, %p240
      %p242 = scmp.ne.s32.totalorder %s234, %s236
      %p243 = scmp.eq.s32.totalorder %s39, 8
      %p244 = por %p242, %p243
      %p245 = scmp.ne.s32.totalorder %s236, %s237
      %p246 = scmp.eq.s32.totalorder %s39, 0
      %p247 = por %p245, %p246
      %p248 = scmp.ne.s32.totalorder %s236, %s237
      %p249 = scmp.eq.s32.totalorder %s40, 8
      %p250 = por %p248, %p249
      %p252 = scmp.ne.s32.totalorder %s237, %s251
      %p253 = scmp.eq.s32.totalorder %s40, 0
      %p254 = por %p252, %p253
      %s255 = ssub.s32 %s41, %s53
      %p256 = scmp.eq.s32.totalorder %s255, 0
      %s258 = sadd.s32 %s257, 1
      %s259 = scalar_select %p256, %s257, %s258
      %p262 = pneg %p256
      %p263 = scmp.eq.s32.totalorder %s34, 8
      %p264 = por %p262, %p263
      %p265 = scmp.ne.s32.totalorder %s257, %s260
      %p266 = scmp.eq.s32.totalorder %s34, 0
      %p267 = por %p265, %p266
      %p268 = scmp.ne.s32.totalorder %s257, %s260
      %p269 = scmp.eq.s32.totalorder %s39, 8
      %p270 = por %p268, %p269
      %p271 = scmp.ne.s32.totalorder %s260, %s261
      %p272 = scmp.eq.s32.totalorder %s39, 0
      %p273 = por %p271, %p272
      %p274 = scmp.ne.s32.totalorder %s260, %s261
      %p275 = scmp.eq.s32.totalorder %s40, 8
      %p276 = por %p274, %p275
      %p278 = scmp.ne.s32.totalorder %s261, %s277
      %p279 = scmp.eq.s32.totalorder %s40, 0
      %p280 = por %p278, %p279
      %p281 = scmp.le.s32.totalorder 1, %s34
      %p282 = scmp.lt.s32.totalorder %s34, 10
      %p283 = pnand %p281, %p282
      %p284 = pneg %p283
      // Predicated region
      $region9: #{tpu_custom_call.1} parent=5 // pred_check
        _
      $region10: #{tpu_custom_call.1} parent=5 // pred_check_branch
        %286 = sbr.rel (%p283) target = $region12
      $region11: #{tpu_custom_call.1} parent=5 // pred_region
        %s287 = ssub.s32 %s34, 1
        // Predicated region
        $region13: #{tpu_custom_call.1} parent=11 // pred_check
          %p288 = pneg %p205
        $region14: #{tpu_custom_call.1} parent=11 // pred_check_branch
          %290 = sbr.rel (%p288) target = $region16
        $region15: #{tpu_custom_call.1} parent=11 // pred_region
          _
        $region16: #{tpu_custom_call.1} parent=11 // pred_fallthru
          _
        // Predicated region
        $region17: #{tpu_custom_call.1} parent=11 // pred_check
          %p291 = pneg %p226
        $region18: #{tpu_custom_call.1} parent=11 // pred_check_branch
          %293 = sbr.rel (%p291) target = $region20
        $region19: #{tpu_custom_call.1} parent=11 // pred_region
          %s295 = ssub.s32 1024, 1024
          %296 = vsyncadd [#allocation11], %s295
          %s297 = sshll.u32 [#allocation12], 4
          %s298 = int_to_ptr.vmem [resolvable:$true] %s297
          %303 = dma.hbm_to_vmem [thread:$0]  %s7, 1024, %s298, [#allocation11], 64, 64, 4
        $region20: #{tpu_custom_call.1} parent=11 // pred_fallthru
          _
        // Predicated region
        $region21: #{tpu_custom_call.1} parent=11 // pred_check
          %p304 = pneg %p247
        $region22: #{tpu_custom_call.1} parent=11 // pred_check_branch
          %306 = sbr.rel (%p304) target = $region24
        $region23: #{tpu_custom_call.1} parent=11 // pred_region
          _
        $region24: #{tpu_custom_call.1} parent=11 // pred_fallthru
          _
      $region12: #{tpu_custom_call.1} parent=5 // pred_fallthru
        _
      %p307 = scmp.lt.s32.totalorder %s34, 9
      // Predicated region
      $region25: #{tpu_custom_call.1} parent=5 // pred_check
        %p308 = pneg %p307
      $region26: #{tpu_custom_call.1} parent=5 // pred_check_branch
        %310 = sbr.rel (%p308) target = $region28
      $region27: #{tpu_custom_call.1} parent=5 // pred_region
        // Predicated region
        $region29: #{tpu_custom_call.1} parent=27 // pred_check
          %p311 = pneg %p84
        $region30: #{tpu_custom_call.1} parent=27 // pred_check_branch
          %313 = sbr.rel (%p311) target = $region32
        $region31: #{tpu_custom_call.1} parent=27 // pred_region
          %s314 = sand.u32 %s74, 1
          %s315 = sand.u32 %s74, 1
          %s316 = smul.addr %s315, 32
          %s317 = scalar_lea.vmem [#allocation6], %s316
          %s318 = sshra.s32 %s42, 7
          %s319 = sand.u32 %s42, 127
          %s320 = sadd.s32 %s318, %s41
          %s321 = smul.u32 %s320, 128
          %s322 = sshra.s32 %s42, 7
          %s323 = sand.u32 %s42, 127
          %s324 = sadd.s32 %s321, %s323
          %s325 = sld [smem:[#allocation5 + %s324]]
          %s326 = smul.u32 4, %s41
          %s327 = smul.addr %s326, 3
          %s328 = sadd.s32 %s325, %s327
          %s329 = smul.addr %s328, 8
          %s330 = scalar_lea.vmem %s2, %s329
          // Predicated region
          $region33: #{tpu_custom_call.1} parent=31 // pred_check
            _
          $region34: #{tpu_custom_call.1} parent=31 // pred_check_branch
            %332 = sbr.rel (0) target = $region36
          $region35: #{tpu_custom_call.1} parent=31 // pred_region
            // Predicated region
            $region37: #{tpu_custom_call.1} parent=35 // pred_check
              _
            $region38: #{tpu_custom_call.1} parent=35 // pred_check_branch
              %334 = sbr.rel (0) target = $region40
            $region39: #{tpu_custom_call.1} parent=35 // pred_region
              // Predicated region
              $region52: #{tpu_custom_call.1} parent=39 // pred_check
                _
              $region53: #{tpu_custom_call.1} parent=39 // pred_check_branch
                %355 = sbr.rel (0) target = $region55
              $region54: #{tpu_custom_call.1} parent=39 // pred_region
                loop: start=0, step=1, limit=1
                $region56: #{tpu_custom_call.1} parent=54 // loop_pre_header
                  _
                $region57: #{tpu_custom_call.1} parent=54 // loop_header
                  %s357 = sphi 0, %s361
                  %p358 = scmp.ge.s32.totalorder %s357, 1
                  %s362 = sphi %s330, %s330
                  %s363 = sphi %s317, %s317
                $region58: #{tpu_custom_call.1} parent=54 // loop_header_branch
                  %360 = sbr.rel (%p358) target = $region62
                $region59: #{tpu_custom_call.1} parent=54 // loop_body
                  %v364 = vld [vmem:[%s362] sm:$0xff]
                  %365 = vst [vmem:[%s363] sm:$0xff] %v364
                  %v366 = vld [vmem:[%s362 + $0x18] sm:$0xff]
                  %367 = vst [vmem:[%s363 + $0x8] sm:$0xff] %v366
                  %v368 = vld [vmem:[%s362 + $0x30] sm:$0xff]
                  %369 = vst [vmem:[%s363 + $0x10] sm:$0xff] %v368
                  %v370 = vld [vmem:[%s362 + $0x48] sm:$0xff]
                  %371 = vst [vmem:[%s363 + $0x18] sm:$0xff] %v370
                $region60: #{tpu_custom_call.1} parent=54 // loop_footer
                  %s361 = sadd.s32 1, %s357
                $region61: #{tpu_custom_call.1} parent=54 // loop_footer_branch
                  %356 = sbr.rel target = $region57
                $region62: #{tpu_custom_call.1} parent=54 // loop_exit
                  _
              $region55: #{tpu_custom_call.1} parent=39 // pred_fallthru
                _
              // Predicated region
              $region63: #{tpu_custom_call.1} parent=39 // pred_check
                _
              $region64: #{tpu_custom_call.1} parent=39 // pred_check_branch
                %373 = sbr.rel target = $region66
              $region65: #{tpu_custom_call.1} parent=39 // pred_region
                _
              $region66: #{tpu_custom_call.1} parent=39 // pred_fallthru
                _
            $region40: #{tpu_custom_call.1} parent=35 // pred_fallthru
              _
            // Predicated region
            $region41: #{tpu_custom_call.1} parent=35 // pred_check
              _
            $region42: #{tpu_custom_call.1} parent=35 // pred_check_branch
              %336 = sbr.rel target = $region44
            $region43: #{tpu_custom_call.1} parent=35 // pred_region
              loop: start=0, step=1, limit=1
              $region45: #{tpu_custom_call.1} parent=43 // loop_pre_header
                _
              $region46: #{tpu_custom_call.1} parent=43 // loop_header
                %s339 = sphi 0, %s343
                %p340 = scmp.ge.s32.totalorder %s339, 1
                %s344 = sphi %s330, %s330
                %s345 = sphi %s317, %s317
              $region47: #{tpu_custom_call.1} parent=43 // loop_header_branch
                %342 = sbr.rel (%p340) target = $region51
              $region48: #{tpu_custom_call.1} parent=43 // loop_body
                %v346 = vld [vmem:[%s344] sm:$0xff]
                %347 = vst [vmem:[%s345] sm:$0xff] %v346
                %v348 = vld [vmem:[%s344 + $0x18] sm:$0xff]
                %349 = vst [vmem:[%s345 + $0x8] sm:$0xff] %v348
                %v350 = vld [vmem:[%s344 + $0x30] sm:$0xff]
                %351 = vst [vmem:[%s345 + $0x10] sm:$0xff] %v350
                %v352 = vld [vmem:[%s344 + $0x48] sm:$0xff]
                %353 = vst [vmem:[%s345 + $0x18] sm:$0xff] %v352
              $region49: #{tpu_custom_call.1} parent=43 // loop_footer
                %s343 = sadd.s32 1, %s339
              $region50: #{tpu_custom_call.1} parent=43 // loop_footer_branch
                %338 = sbr.rel target = $region46
              $region51: #{tpu_custom_call.1} parent=43 // loop_exit
                _
            $region44: #{tpu_custom_call.1} parent=35 // pred_fallthru
              _
          $region36: #{tpu_custom_call.1} parent=31 // pred_fallthru
            _
          %374 = vnop
        $region32: #{tpu_custom_call.1} parent=27 // pred_fallthru
          _
        // Predicated region
        $region67: #{tpu_custom_call.1} parent=27 // pred_check
          %p375 = pneg %p126
        $region68: #{tpu_custom_call.1} parent=27 // pred_check_branch
          %377 = sbr.rel (%p375) target = $region70
        $region69: #{tpu_custom_call.1} parent=27 // pred_region
          %s378 = sand.u32 %s116, 1
          %s379 = scalar_lea.sflag [#allocation8], %s378
          %s380 = sand.u32 %s116, 1
          %s381 = smul.addr %s380, 64
          %s382 = scalar_lea.vmem [#allocation7], %s381
          %s383 = sshra.s32 %s42, 7
          %s384 = sand.u32 %s42, 127
          %s385 = sadd.s32 %s383, %s41
          %s386 = smul.u32 %s385, 128
          %s387 = sshra.s32 %s42, 7
          %s388 = sand.u32 %s42, 127
          %s389 = sadd.s32 %s386, %s388
          %s390 = sld [smem:[#allocation5 + %s389]]
          %s391 = smul.u32 16, %s390
          %s393 = ssub.s32 1024, 1024
          %394 = vsyncadd %s379, %s393
          %s395 = smul.addr %s391, 64
          %s396 = scalar_lea.hbm %s3, %s395
          %s397 = sshll.u32 %s382, 4
          %s398 = int_to_ptr.vmem [resolvable:$true] %s397
          %403 = dma.hbm_to_vmem [thread:$0]  %s396, 1024, %s398, %s379, 64, 64, 4
        $region70: #{tpu_custom_call.1} parent=27 // pred_fallthru
          _
        // Predicated region
        $region71: #{tpu_custom_call.1} parent=27 // pred_check
          %p404 = pneg %p152
        $region72: #{tpu_custom_call.1} parent=27 // pred_check_branch
          %406 = sbr.rel (%p404) target = $region74
        $region73: #{tpu_custom_call.1} parent=27 // pred_region
          %s407 = sand.u32 %s34, 1
          %s408 = scalar_lea.sflag [#allocation11], %s407
          %s409 = sand.u32 %s142, 1
          %s410 = smul.addr %s409, 64
          %s411 = scalar_lea.vmem [#allocation10], %s410
          %s412 = smul.u32 16, %s41
          %s414 = ssub.s32 1024, 1024
          %415 = vsyncadd %s408, %s414
          %s416 = smul.addr %s412, 64
          %s417 = scalar_lea.hbm %s4, %s416
          %s418 = sshll.u32 %s411, 4
          %s419 = int_to_ptr.vmem [resolvable:$true] %s418
          %424 = dma.hbm_to_vmem [thread:$0]  %s417, 1024, %s419, %s408, 64, 64, 4
        $region74: #{tpu_custom_call.1} parent=27 // pred_fallthru
          _
        // Predicated region
        $region75: #{tpu_custom_call.1} parent=27 // pred_check
          %p425 = pneg %p178
        $region76: #{tpu_custom_call.1} parent=27 // pred_check_branch
          %427 = sbr.rel (%p425) target = $region78
        $region77: #{tpu_custom_call.1} parent=27 // pred_region
          %s428 = smul.u32 16, %s41
          %p429 = scmp.lt.s32.totalorder %s428, 47
          %s430 = scalar_select %p429, %s428, 47
          %s431 = smul.addr %s430, 8
          %s432 = scalar_lea.vmem %s5, %s431
          %s433 = smul.u32 16, %s41
        $region78: #{tpu_custom_call.1} parent=27 // pred_fallthru
          _
      $region28: #{tpu_custom_call.1} parent=5 // pred_fallthru
        _
      %p434 = scmp.le.s32.totalorder 1, %s34
      %p435 = scmp.lt.s32.totalorder %s34, 10
      %p436 = pnand %p434, %p435
      %p437 = pneg %p436
      // Predicated region
      $region79: #{tpu_custom_call.1} parent=5 // pred_check
        _
      $region80: #{tpu_custom_call.1} parent=5 // pred_check_branch
        %439 = sbr.rel (%p436) target = $region82
      $region81: #{tpu_custom_call.1} parent=5 // pred_region
        %s440 = ssub.s32 %s34, 1
        %s441 = sand.u32 %s77, 1
        %s442 = sand.u32 %s77, 1
        %s443 = smul.addr %s442, 32
        %s444 = scalar_lea.vmem [#allocation6], %s443
        // Predicated region
        $region83: #{tpu_custom_call.1} parent=81 // pred_check
          %p445 = pneg %p90
        $region84: #{tpu_custom_call.1} parent=81 // pred_check_branch
          %447 = sbr.rel (%p445) target = $region86
        $region85: #{tpu_custom_call.1} parent=81 // pred_region
          _
        $region86: #{tpu_custom_call.1} parent=81 // pred_fallthru
          _
        %s448 = sand.u32 %s119, 1
        %s449 = scalar_lea.sflag [#allocation8], %s448
        %s450 = sand.u32 %s119, 1
        %s451 = smul.addr %s450, 64
        %s452 = scalar_lea.vmem [#allocation7], %s451
        // Predicated region
        $region87: #{tpu_custom_call.1} parent=81 // pred_check
          %p453 = pneg %p132
        $region88: #{tpu_custom_call.1} parent=81 // pred_check_branch
          %455 = sbr.rel (%p453) target = $region90
        $region89: #{tpu_custom_call.1} parent=81 // pred_region
          %456 = dma.done %s449, 1024
        $region90: #{tpu_custom_call.1} parent=81 // pred_fallthru
          _
        %s457 = sand.u32 %s39, 1
        %s458 = scalar_lea.sflag [#allocation11], %s457
        %s459 = sand.u32 %s145, 1
        %s460 = smul.addr %s459, 64
        %s461 = scalar_lea.vmem [#allocation10], %s460
        // Predicated region
        $region91: #{tpu_custom_call.1} parent=81 // pred_check
          %p462 = pneg %p158
        $region92: #{tpu_custom_call.1} parent=81 // pred_check_branch
          %464 = sbr.rel (%p462) target = $region94
        $region93: #{tpu_custom_call.1} parent=81 // pred_region
          %465 = dma.done %s458, 1024
        $region94: #{tpu_custom_call.1} parent=81 // pred_fallthru
          _
        // Predicated region
        $region95: #{tpu_custom_call.1} parent=81 // pred_check
          %p466 = pneg %p226
        $region96: #{tpu_custom_call.1} parent=81 // pred_check_branch
          %468 = sbr.rel (%p466) target = $region98
        $region97: #{tpu_custom_call.1} parent=81 // pred_region
          %469 = dma.done [#allocation11], 1024
        $region98: #{tpu_custom_call.1} parent=81 // pred_fallthru
          _
        %s470 = sand.u32 %s77, 1
        %s471 = sand.u32 %s77, 1
        %s472 = smul.addr %s471, 32
        %s473 = scalar_lea.vmem [#allocation6], %s472
        %p474 = pneg %p90
        %p475 = pneg %p87
        %s476 = sand.u32 %s119, 1
        %s477 = scalar_lea.sflag [#allocation8], %s476
        %s478 = sand.u32 %s119, 1
        %s479 = smul.addr %s478, 64
        %s480 = scalar_lea.vmem [#allocation7], %s479
        %p481 = pneg %p132
        %p482 = pneg %p129
        %s483 = sand.u32 %s39, 1
        %s484 = scalar_lea.sflag [#allocation11], %s483
        %s485 = sand.u32 %s145, 1
        %s486 = smul.addr %s485, 64
        %s487 = scalar_lea.vmem [#allocation10], %s486
        %p488 = pneg %p158
        %p489 = pneg %p155
        %s490 = smul.u32 16, %s43
        %p491 = scmp.lt.s32.totalorder %s490, 47
        %s492 = scalar_select %p491, %s490, 47
        %s493 = smul.addr %s492, 8
        %s494 = scalar_lea.vmem %s5, %s493
        %p495 = pneg %p184
        %p496 = pneg %p181
        %p497 = pneg %p205
        %p498 = pneg %p202
        %p499 = pneg %p226
        %p500 = pneg %p223
        %p501 = pneg %p247
        %p502 = pneg %p244
        %p503 = pneg %p273
        %p504 = pneg %p270
        %s505 = sand.u32 %s260, 1
        %s506 = scalar_lea.sflag [#allocation9], %s505
        %s507 = sand.u32 %s260, 1
        %s508 = smul.addr %s507, 64
        %s509 = scalar_lea.vmem [#allocation13], %s508
        %s510 = sshra.s32 %s44, 7
        %s511 = sand.u32 %s44, 127
        %s512 = sadd.s32 %s510, %s43
        %s513 = smul.u32 %s512, 128
        %s514 = sshra.s32 %s44, 7
        %s515 = sand.u32 %s44, 127
        %s516 = sadd.s32 %s513, %s515
        %s517 = sld [smem:[#allocation5 + %s516]]
        %s518 = smul.u32 4, %s43
        %s519 = sshra.s32 %s44, 7
        %s520 = sand.u32 %s44, 127
        %s521 = sadd.s32 %s519, %s43
        %s522 = smul.u32 %s521, 128
        %s523 = sshra.s32 %s44, 7
        %s524 = sand.u32 %s44, 127
        %s525 = sadd.s32 %s522, %s524
        %s526 = sld [smem:[#allocation5 + %s525]]
        %s527 = smul.u32 16, %s526
        %s528 = smul.u32 16, %s43
        %s529 = smul.u32 16, %s43
        %p530 = scmp.lt.s32.totalorder %s529, 47
        %s531 = scalar_select %p530, %s529, 47
        %s532 = smul.addr %s531, 8
        %s533 = scalar_lea.vmem %s5, %s532
        %s534 = smul.u32 16, %s43
        %s535 = smul.u32 16, %s43
        %p537 = scmp.eq.s32.totalorder %s44, 0
        // Predicated region
        $region99: #{tpu_custom_call.1} parent=81 // pred_check
          %p538 = pneg %p537
        $region100: #{tpu_custom_call.1} parent=81 // pred_check_branch
          %540 = sbr.rel (%p538) target = $region102
        $region101: #{tpu_custom_call.1} parent=81 // pred_region
          %541 = vst [vmem:[#allocation2] sm:$0xff] 0.0
          %542 = vst [vmem:[#allocation2 + $0x8] sm:$0xff] 0.0
          %543 = vst [vmem:[#allocation2 + $0x10] sm:$0xff] 0.0
          %544 = vst [vmem:[#allocation2 + $0x18] sm:$0xff] 0.0
          %545 = vst [vmem:[#allocation2 + $0x20] sm:$0xff] 0.0
          %546 = vst [vmem:[#allocation2 + $0x28] sm:$0xff] 0.0
          %547 = vst [vmem:[#allocation2 + $0x30] sm:$0xff] 0.0
          %548 = vst [vmem:[#allocation2 + $0x38] sm:$0xff] 0.0
          %549 = vst [vmem:[#allocation2 + $0x40] sm:$0xff] 0.0
          %550 = vst [vmem:[#allocation2 + $0x48] sm:$0xff] 0.0
          %551 = vst [vmem:[#allocation2 + $0x50] sm:$0xff] 0.0
          %552 = vst [vmem:[#allocation2 + $0x58] sm:$0xff] 0.0
          %553 = vst [vmem:[#allocation2 + $0x60] sm:$0xff] 0.0
          %554 = vst [vmem:[#allocation2 + $0x68] sm:$0xff] 0.0
          %555 = vst [vmem:[#allocation2 + $0x70] sm:$0xff] 0.0
          %556 = vst [vmem:[#allocation2 + $0x78] sm:$0xff] 0.0
        $region102: #{tpu_custom_call.1} parent=81 // pred_fallthru
          _
        %s557 = sld [smem:[#allocation4 + %s43]]
        %p558 = scmp.lt.s32.totalorder %s44, %s557
        // Predicated region
        $region103: #{tpu_custom_call.1} parent=81 // pred_check
          %p559 = pneg %p558
        $region104: #{tpu_custom_call.1} parent=81 // pred_check_branch
          %561 = sbr.rel (%p559) target = $region106
        $region105: #{tpu_custom_call.1} parent=81 // pred_region
          %v562 = vld [vmem:[%s444] sm:$0xff]
          %v563 = vld [vmem:[%s444 + $0x8] sm:$0xff]
          %v564 = vld [vmem:[%s444 + $0x10] sm:$0xff]
          %v565 = vld [vmem:[%s444 + $0x18] sm:$0xff]
          %v566 = vunpack.c.l.s8.bf16 %v562
          %v567 = vunpack.c.h.s8.bf16 %v562
          %v568 = vunpack.c.l.s8.bf16 %v563
          %v569 = vunpack.c.h.s8.bf16 %v563
          %v570 = vunpack.c.l.s8.bf16 %v564
          %v571 = vunpack.c.h.s8.bf16 %v564
          %v572 = vunpack.c.l.s8.bf16 %v565
          %v573 = vunpack.c.h.s8.bf16 %v565
          %v574 = vld [vmem:[#allocation2] sm:$0xff]
          %v575 = vld [vmem:[#allocation2 + $0x8] sm:$0xff]
          %v576 = vld [vmem:[#allocation2 + $0x10] sm:$0xff]
          %v577 = vld [vmem:[#allocation2 + $0x18] sm:$0xff]
          %v578 = vld [vmem:[#allocation2 + $0x20] sm:$0xff]
          %v579 = vld [vmem:[#allocation2 + $0x28] sm:$0xff]
          %v580 = vld [vmem:[#allocation2 + $0x30] sm:$0xff]
          %v581 = vld [vmem:[#allocation2 + $0x38] sm:$0xff]
          %v582 = vld [vmem:[#allocation2 + $0x40] sm:$0xff]
          %v583 = vld [vmem:[#allocation2 + $0x48] sm:$0xff]
          %v584 = vld [vmem:[#allocation2 + $0x50] sm:$0xff]
          %v585 = vld [vmem:[#allocation2 + $0x58] sm:$0xff]
          %v586 = vld [vmem:[#allocation2 + $0x60] sm:$0xff]
          %v587 = vld [vmem:[#allocation2 + $0x68] sm:$0xff]
          %v588 = vld [vmem:[#allocation2 + $0x70] sm:$0xff]
          %v589 = vld [vmem:[#allocation2 + $0x78] sm:$0xff]
          %v590 = vld [vmem:[%s452] sm:$0xf]
          %v591 = vld [vmem:[%s452 + $0x4] sm:$0xf]
          %v592 = vld [vmem:[%s452 + $0x8] sm:$0xf]
          %v593 = vld [vmem:[%s452 + $0xc] sm:$0xf]
          %v594 = vld [vmem:[%s452 + $0x10] sm:$0xf]
          %v595 = vld [vmem:[%s452 + $0x14] sm:$0xf]
          %v596 = vld [vmem:[%s452 + $0x18] sm:$0xf]
          %v597 = vld [vmem:[%s452 + $0x1c] sm:$0xf]
          %v598 = vld [vmem:[%s452 + $0x20] sm:$0xf]
          %v599 = vld [vmem:[%s452 + $0x24] sm:$0xf]
          %v600 = vld [vmem:[%s452 + $0x28] sm:$0xf]
          %v601 = vld [vmem:[%s452 + $0x2c] sm:$0xf]
          %v602 = vld [vmem:[%s452 + $0x30] sm:$0xf]
          %v603 = vld [vmem:[%s452 + $0x34] sm:$0xf]
          %v604 = vld [vmem:[%s452 + $0x38] sm:$0xf]
          %v605 = vld [vmem:[%s452 + $0x3c] sm:$0xf]
          %v622 = vunpack.c.l.b16 %v590
          %v623 = vunpack.c.l.b16 %v591
          %v624 = vunpack.c.l.b16 %v592
          %v625 = vunpack.c.l.b16 %v593
          %v626 = vunpack.c.l.b16 %v594
          %v627 = vunpack.c.l.b16 %v595
          %v628 = vunpack.c.l.b16 %v596
          %v629 = vunpack.c.l.b16 %v597
          %v630 = vunpack.c.l.b16 %v598
          %v631 = vunpack.c.l.b16 %v599
          %v632 = vunpack.c.l.b16 %v600
          %v633 = vunpack.c.l.b16 %v601
          %v634 = vunpack.c.l.b16 %v602
          %v635 = vunpack.c.l.b16 %v603
          %v636 = vunpack.c.l.b16 %v604
          %v637 = vunpack.c.l.b16 %v605
          %v638 = vpack.c.b16 %v623, %v622
          %v639 = vpack.c.b16 %v625, %v624
          %v640 = vpack.c.b16 %v627, %v626
          %v641 = vpack.c.b16 %v629, %v628
          %v642 = vpack.c.b16 %v631, %v630
          %v643 = vpack.c.b16 %v633, %v632
          %v644 = vpack.c.b16 %v635, %v634
          %v645 = vpack.c.b16 %v637, %v636
          %654 = vmatprep.subr.bf16.mxu0 0
          %655 = vmatpush1.bf16.msra.mxu0 %v638
          %656 = vmatprep.subr.bf16.mxu0 0
          %657 = vmatpush1.bf16.msra.mxu0 %v639
          %658 = vmatprep.subr.bf16.mxu0 0
          %659 = vmatpush1.bf16.msra.mxu0 %v640
          %660 = vmatprep.subr.bf16.mxu0 0
          %661 = vmatpush1.bf16.msra.mxu0 %v641
          %662 = vmatprep.subr.bf16.mxu0 0
          %663 = vmatpush1.bf16.msra.mxu0 %v642
          %664 = vmatprep.subr.bf16.mxu0 0
          %665 = vmatpush1.bf16.msra.mxu0 %v643
          %666 = vmatprep.subr.bf16.mxu0 0
          %667 = vmatpush1.bf16.msra.mxu0 %v644
          %668 = vmatprep.subr.bf16.mxu0 0
          %669 = vmatpush1.bf16.msra.mxu0 %v645
          %670 = vmatprep.subr.bf16.mxu0 0
          %671 = vmatpush1.bf16.msra.mxu0 0
          %672 = vmatprep.subr.bf16.mxu0 0
          %673 = vmatpush1.bf16.msra.mxu0 0
          %674 = vmatprep.subr.bf16.mxu0 0
          %675 = vmatpush1.bf16.msra.mxu0 0
          %676 = vmatprep.subr.bf16.mxu0 0
          %677 = vmatpush1.bf16.msra.mxu0 0
          %678 = vmatprep.subr.bf16.mxu0 0
          %679 = vmatpush1.bf16.msra.mxu0 0
          %680 = vmatprep.subr.bf16.mxu0 0
          %681 = vmatpush1.bf16.msra.mxu0 0
          %682 = vmatprep.subr.bf16.mxu0 0
          %683 = vmatpush1.bf16.msra.mxu0 0
          %684 = vmatprep.subr.bf16.mxu0 0
          %685 = vmatpush1.bf16.msra.mxu0 0
          %686 = vmatprep.mubr.bf16.mxu0 0
          %687 = vmatmul.mubr.bf16.gmra.mrb[0].mxu0 %v566
          %v688 = vpop.f32.mrb[0].mxu0
          %v689 = vadd.f32 0.0, %v688
          %v690 = vpop.f32.mrb[0].mxu0
          %v691 = vpop.f32.mrb[0].mxu0
          %v692 = vadd.f32 0.0, %v691
          %v693 = vpop.f32.mrb[0].mxu0
          %694 = vmatprep.mubr.bf16.mxu0 0
          %695 = vmatmul.mubr.bf16.gmra.mrb[0].mxu0 %v567
          %v696 = vpop.f32.mrb[0].mxu0
          %v697 = vadd.f32 0.0, %v696
          %v698 = vpop.f32.mrb[0].mxu0
          %v699 = vpop.f32.mrb[0].mxu0
          %v700 = vadd.f32 0.0, %v699
          %v701 = vpop.f32.mrb[0].mxu0
          %702 = vmatprep.mubr.bf16.mxu0 0
          %703 = vmatmul.mubr.bf16.gmra.mrb[0].mxu0 %v568
          %v704 = vpop.f32.mrb[0].mxu0
          %v705 = vadd.f32 0.0, %v704
          %v706 = vpop.f32.mrb[0].mxu0
          %v707 = vpop.f32.mrb[0].mxu0
          %v708 = vadd.f32 0.0, %v707
          %v709 = vpop.f32.mrb[0].mxu0
          %710 = vmatprep.mubr.bf16.mxu0 0
          %711 = vmatmul.mubr.bf16.gmra.mrb[0].mxu0 %v569
          %v712 = vpop.f32.mrb[0].mxu0
          %v713 = vadd.f32 0.0, %v712
          %v714 = vpop.f32.mrb[0].mxu0
          %v715 = vpop.f32.mrb[0].mxu0
          %v716 = vadd.f32 0.0, %v715
          %v717 = vpop.f32.mrb[0].mxu0
          %718 = vmatprep.mubr.bf16.mxu0 0
          %719 = vmatmul.mubr.bf16.gmra.mrb[0].mxu0 %v570
          %v720 = vpop.f32.mrb[0].mxu0
          %v721 = vadd.f32 0.0, %v720
          %v722 = vpop.f32.mrb[0].mxu0
          %v723 = vpop.f32.mrb[0].mxu0
          %v724 = vadd.f32 0.0, %v723
          %v725 = vpop.f32.mrb[0].mxu0
          %726 = vmatprep.mubr.bf16.mxu0 0
          %727 = vmatmul.mubr.bf16.gmra.mrb[0].mxu0 %v571
          %v728 = vpop.f32.mrb[0].mxu0
          %v729 = vadd.f32 0.0, %v728
          %v730 = vpop.f32.mrb[0].mxu0
          %v731 = vpop.f32.mrb[0].mxu0
          %v732 = vadd.f32 0.0, %v731
          %v733 = vpop.f32.mrb[0].mxu0
          %734 = vmatprep.mubr.bf16.mxu0 0
          %735 = vmatmul.mubr.bf16.gmra.mrb[0].mxu0 %v572
          %v736 = vpop.f32.mrb[0].mxu0
          %v737 = vadd.f32 0.0, %v736
          %v738 = vpop.f32.mrb[0].mxu0
          %v739 = vpop.f32.mrb[0].mxu0
          %v740 = vadd.f32 0.0, %v739
          %v741 = vpop.f32.mrb[0].mxu0
          %742 = vmatprep.mubr.bf16.mxu0 0
          %743 = vmatmul.mubr.bf16.gmra.mrb[0].mxu0 %v573
          %v744 = vpop.f32.mrb[0].mxu0
          %v745 = vadd.f32 0.0, %v744
          %v746 = vpop.f32.mrb[0].mxu0
          %v747 = vpop.f32.mrb[0].mxu0
          %v748 = vadd.f32 0.0, %v747
          %v749 = vpop.f32.mrb[0].mxu0
          %750 = vdwg.mxu0
          %v751 = vadd.f32 %v574, %v689
          %v752 = vadd.f32 %v575, %v692
          %v753 = vadd.f32 %v576, %v697
          %v754 = vadd.f32 %v577, %v700
          %v755 = vadd.f32 %v578, %v705
          %v756 = vadd.f32 %v579, %v708
          %v757 = vadd.f32 %v580, %v713
          %v758 = vadd.f32 %v581, %v716
          %v759 = vadd.f32 %v582, %v721
          %v760 = vadd.f32 %v583, %v724
          %v761 = vadd.f32 %v584, %v729
          %v762 = vadd.f32 %v585, %v732
          %v763 = vadd.f32 %v586, %v737
          %v764 = vadd.f32 %v587, %v740
          %v765 = vadd.f32 %v588, %v745
          %v766 = vadd.f32 %v589, %v748
          %767 = vst [vmem:[#allocation2] sm:$0xff] %v751
          %768 = vst [vmem:[#allocation2 + $0x8] sm:$0xff] %v752
          %769 = vst [vmem:[#allocation2 + $0x10] sm:$0xff] %v753
          %770 = vst [vmem:[#allocation2 + $0x18] sm:$0xff] %v754
          %771 = vst [vmem:[#allocation2 + $0x20] sm:$0xff] %v755
          %772 = vst [vmem:[#allocation2 + $0x28] sm:$0xff] %v756
          %773 = vst [vmem:[#allocation2 + $0x30] sm:$0xff] %v757
          %774 = vst [vmem:[#allocation2 + $0x38] sm:$0xff] %v758
          %775 = vst [vmem:[#allocation2 + $0x40] sm:$0xff] %v759
          %776 = vst [vmem:[#allocation2 + $0x48] sm:$0xff] %v760
          %777 = vst [vmem:[#allocation2 + $0x50] sm:$0xff] %v761
          %778 = vst [vmem:[#allocation2 + $0x58] sm:$0xff] %v762
          %779 = vst [vmem:[#allocation2 + $0x60] sm:$0xff] %v763
          %780 = vst [vmem:[#allocation2 + $0x68] sm:$0xff] %v764
          %781 = vst [vmem:[#allocation2 + $0x70] sm:$0xff] %v765
          %782 = vst [vmem:[#allocation2 + $0x78] sm:$0xff] %v766
        $region106: #{tpu_custom_call.1} parent=81 // pred_fallthru
          _
        %p783 = scmp.eq.s32.totalorder %s44, 2
        // Predicated region
        $region107: #{tpu_custom_call.1} parent=81 // pred_check
          %p784 = pneg %p783
        $region108: #{tpu_custom_call.1} parent=81 // pred_check_branch
          %786 = sbr.rel (%p784) target = $region110
        $region109: #{tpu_custom_call.1} parent=81 // pred_region
          %v787 = vld [vmem:[#allocation2] sm:$0xff]
          %v788 = vld [vmem:[#allocation2 + $0x8] sm:$0xff]
          %v789 = vld [vmem:[#allocation2 + $0x10] sm:$0xff]
          %v790 = vld [vmem:[#allocation2 + $0x18] sm:$0xff]
          %v791 = vld [vmem:[#allocation2 + $0x20] sm:$0xff]
          %v792 = vld [vmem:[#allocation2 + $0x28] sm:$0xff]
          %v793 = vld [vmem:[#allocation2 + $0x30] sm:$0xff]
          %v794 = vld [vmem:[#allocation2 + $0x38] sm:$0xff]
          %v795 = vld [vmem:[#allocation2 + $0x40] sm:$0xff]
          %v796 = vld [vmem:[#allocation2 + $0x48] sm:$0xff]
          %v797 = vld [vmem:[#allocation2 + $0x50] sm:$0xff]
          %v798 = vld [vmem:[#allocation2 + $0x58] sm:$0xff]
          %v799 = vld [vmem:[#allocation2 + $0x60] sm:$0xff]
          %v800 = vld [vmem:[#allocation2 + $0x68] sm:$0xff]
          %v801 = vld [vmem:[#allocation2 + $0x70] sm:$0xff]
          %v802 = vld [vmem:[#allocation2 + $0x78] sm:$0xff]
          %v803 = vld [vmem:[%s533] sm:$0xff]
          %v804 = vld [vmem:[%s533 + $0x8] sm:$0xff]
          %v805 = vld [vmem:[%s533 + $0x10] sm:$0xff]
          %v806 = vld [vmem:[%s533 + $0x18] sm:$0xff]
          %v807 = vld [vmem:[%s533 + $0x20] sm:$0xff]
          %v808 = vld [vmem:[%s533 + $0x28] sm:$0xff]
          %v809 = vld [vmem:[%s533 + $0x30] sm:$0xff]
          %v810 = vld [vmem:[%s533 + $0x38] sm:$0xff]
          %v811 = vld [vmem:[%s533 + $0x40] sm:$0xff]
          %v812 = vld [vmem:[%s533 + $0x48] sm:$0xff]
          %v813 = vld [vmem:[%s533 + $0x50] sm:$0xff]
          %v814 = vld [vmem:[%s533 + $0x58] sm:$0xff]
          %v815 = vld [vmem:[%s533 + $0x60] sm:$0xff]
          %v816 = vld [vmem:[%s533 + $0x68] sm:$0xff]
          %v817 = vld [vmem:[%s533 + $0x70] sm:$0xff]
          %v818 = vld [vmem:[%s533 + $0x78] sm:$0xff]
          %820 = vset.pattern.permute.xlu0 0
          %821 = vperm.xlu0 %820, %v803
          %v822 = vpop.permute.xlu0 %821
          %825 = vset.pattern.permute.xlu0 0
          %826 = vperm.xlu0 %825, %v804
          %v827 = vpop.permute.xlu0 %826
          %830 = vset.pattern.permute.xlu0 0
          %831 = vperm.xlu0 %830, %v805
          %v832 = vpop.permute.xlu0 %831
          %835 = vset.pattern.permute.xlu0 0
          %836 = vperm.xlu0 %835, %v806
          %v837 = vpop.permute.xlu0 %836
          %840 = vset.pattern.permute.xlu0 0
          %841 = vperm.xlu0 %840, %v807
          %v842 = vpop.permute.xlu0 %841
          %845 = vset.pattern.permute.xlu0 0
          %846 = vperm.xlu0 %845, %v808
          %v847 = vpop.permute.xlu0 %846
          %850 = vset.pattern.permute.xlu0 0
          %851 = vperm.xlu0 %850, %v809
          %v852 = vpop.permute.xlu0 %851
          %855 = vset.pattern.permute.xlu0 0
          %856 = vperm.xlu0 %855, %v810
          %v857 = vpop.permute.xlu0 %856
          %860 = vset.pattern.permute.xlu0 0
          %861 = vperm.xlu0 %860, %v811
          %v862 = vpop.permute.xlu0 %861
          %865 = vset.pattern.permute.xlu0 0
          %866 = vperm.xlu0 %865, %v812
          %v867 = vpop.permute.xlu0 %866
          %870 = vset.pattern.permute.xlu0 0
          %871 = vperm.xlu0 %870, %v813
          %v872 = vpop.permute.xlu0 %871
          %875 = vset.pattern.permute.xlu0 0
          %876 = vperm.xlu0 %875, %v814
          %v877 = vpop.permute.xlu0 %876
          %880 = vset.pattern.permute.xlu0 0
          %881 = vperm.xlu0 %880, %v815
          %v882 = vpop.permute.xlu0 %881
          %885 = vset.pattern.permute.xlu0 0
          %886 = vperm.xlu0 %885, %v816
          %v887 = vpop.permute.xlu0 %886
          %890 = vset.pattern.permute.xlu0 0
          %891 = vperm.xlu0 %890, %v817
          %v892 = vpop.permute.xlu0 %891
          %895 = vset.pattern.permute.xlu0 0
          %896 = vperm.xlu0 %895, %v818
          %v897 = vpop.permute.xlu0 %896
          %v899 = vmul.f32 %v787, %v822
          %v900 = vmul.f32 %v788, %v827
          %v901 = vmul.f32 %v789, %v832
          %v902 = vmul.f32 %v790, %v837
          %v903 = vmul.f32 %v791, %v842
          %v904 = vmul.f32 %v792, %v847
          %v905 = vmul.f32 %v793, %v852
          %v906 = vmul.f32 %v794, %v857
          %v907 = vmul.f32 %v795, %v862
          %v908 = vmul.f32 %v796, %v867
          %v909 = vmul.f32 %v797, %v872
          %v910 = vmul.f32 %v798, %v877
          %v911 = vmul.f32 %v799, %v882
          %v912 = vmul.f32 %v800, %v887
          %v913 = vmul.f32 %v801, %v892
          %v914 = vmul.f32 %v802, %v897
          %v915 = vpack.c.bf16 %v900, %v899
          %v916 = vpack.c.bf16 %v902, %v901
          %v917 = vpack.c.bf16 %v904, %v903
          %v918 = vpack.c.bf16 %v906, %v905
          %v919 = vpack.c.bf16 %v908, %v907
          %v920 = vpack.c.bf16 %v910, %v909
          %v921 = vpack.c.bf16 %v912, %v911
          %v922 = vpack.c.bf16 %v914, %v913
          %v923 = vld [vmem:[%s6] sm:$0xf]
          %v924 = vld [vmem:[%s6 + $0x4] sm:$0xf]
          %v925 = vld [vmem:[%s6 + $0x8] sm:$0xf]
          %v926 = vld [vmem:[%s6 + $0xc] sm:$0xf]
          %v927 = vld [vmem:[%s6 + $0x10] sm:$0xf]
          %v928 = vld [vmem:[%s6 + $0x14] sm:$0xf]
          %v929 = vld [vmem:[%s6 + $0x18] sm:$0xf]
          %v930 = vld [vmem:[%s6 + $0x1c] sm:$0xf]
          %v931 = vld [vmem:[%s6 + $0x20] sm:$0xf]
          %v932 = vld [vmem:[%s6 + $0x24] sm:$0xf]
          %v933 = vld [vmem:[%s6 + $0x28] sm:$0xf]
          %v934 = vld [vmem:[%s6 + $0x2c] sm:$0xf]
          %v935 = vld [vmem:[%s6 + $0x30] sm:$0xf]
          %v936 = vld [vmem:[%s6 + $0x34] sm:$0xf]
          %v937 = vld [vmem:[%s6 + $0x38] sm:$0xf]
          %v938 = vld [vmem:[%s6 + $0x3c] sm:$0xf]
          %v939 = vld [vmem:[%s461] sm:$0xf]
          %v940 = vld [vmem:[%s461 + $0x4] sm:$0xf]
          %v941 = vld [vmem:[%s461 + $0x8] sm:$0xf]
          %v942 = vld [vmem:[%s461 + $0xc] sm:$0xf]
          %v943 = vld [vmem:[%s461 + $0x10] sm:$0xf]
          %v944 = vld [vmem:[%s461 + $0x14] sm:$0xf]
          %v945 = vld [vmem:[%s461 + $0x18] sm:$0xf]
          %v946 = vld [vmem:[%s461 + $0x1c] sm:$0xf]
          %v947 = vld [vmem:[%s461 + $0x20] sm:$0xf]
          %v948 = vld [vmem:[%s461 + $0x24] sm:$0xf]
          %v949 = vld [vmem:[%s461 + $0x28] sm:$0xf]
          %v950 = vld [vmem:[%s461 + $0x2c] sm:$0xf]
          %v951 = vld [vmem:[%s461 + $0x30] sm:$0xf]
          %v952 = vld [vmem:[%s461 + $0x34] sm:$0xf]
          %v953 = vld [vmem:[%s461 + $0x38] sm:$0xf]
          %v954 = vld [vmem:[%s461 + $0x3c] sm:$0xf]
          %v955 = vld [vmem:[#allocation12] sm:$0xf]
          %v956 = vld [vmem:[#allocation12 + $0x4] sm:$0xf]
          %v957 = vld [vmem:[#allocation12 + $0x8] sm:$0xf]
          %v958 = vld [vmem:[#allocation12 + $0xc] sm:$0xf]
          %v959 = vld [vmem:[#allocation12 + $0x10] sm:$0xf]
          %v960 = vld [vmem:[#allocation12 + $0x14] sm:$0xf]
          %v961 = vld [vmem:[#allocation12 + $0x18] sm:$0xf]
          %v962 = vld [vmem:[#allocation12 + $0x1c] sm:$0xf]
          %v963 = vld [vmem:[#allocation12 + $0x20] sm:$0xf]
          %v964 = vld [vmem:[#allocation12 + $0x24] sm:$0xf]
          %v965 = vld [vmem:[#allocation12 + $0x28] sm:$0xf]
          %v966 = vld [vmem:[#allocation12 + $0x2c] sm:$0xf]
          %v967 = vld [vmem:[#allocation12 + $0x30] sm:$0xf]
          %v968 = vld [vmem:[#allocation12 + $0x34] sm:$0xf]
          %v969 = vld [vmem:[#allocation12 + $0x38] sm:$0xf]
          %v970 = vld [vmem:[#allocation12 + $0x3c] sm:$0xf]
          %v987 = vunpack.c.l.b16 %v939
          %v988 = vunpack.c.l.b16 %v940
          %v989 = vunpack.c.l.b16 %v941
          %v990 = vunpack.c.l.b16 %v942
          %v991 = vunpack.c.l.b16 %v943
          %v992 = vunpack.c.l.b16 %v944
          %v993 = vunpack.c.l.b16 %v945
          %v994 = vunpack.c.l.b16 %v946
          %v995 = vunpack.c.l.b16 %v947
          %v996 = vunpack.c.l.b16 %v948
          %v997 = vunpack.c.l.b16 %v949
          %v998 = vunpack.c.l.b16 %v950
          %v999 = vunpack.c.l.b16 %v951
          %v1000 = vunpack.c.l.b16 %v952
          %v1001 = vunpack.c.l.b16 %v953
          %v1002 = vunpack.c.l.b16 %v954
          %v1003 = vpack.c.b16 %v988, %v987
          %v1004 = vpack.c.b16 %v990, %v989
          %v1005 = vpack.c.b16 %v992, %v991
          %v1006 = vpack.c.b16 %v994, %v993
          %v1007 = vpack.c.b16 %v996, %v995
          %v1008 = vpack.c.b16 %v998, %v997
          %v1009 = vpack.c.b16 %v1000, %v999
          %v1010 = vpack.c.b16 %v1002, %v1001
          %v1035 = vunpack.c.l.b16 %v955
          %v1036 = vunpack.c.l.b16 %v956
          %v1037 = vunpack.c.l.b16 %v957
          %v1038 = vunpack.c.l.b16 %v958
          %v1039 = vunpack.c.l.b16 %v959
          %v1040 = vunpack.c.l.b16 %v960
          %v1041 = vunpack.c.l.b16 %v961
          %v1042 = vunpack.c.l.b16 %v962
          %v1043 = vunpack.c.l.b16 %v963
          %v1044 = vunpack.c.l.b16 %v964
          %v1045 = vunpack.c.l.b16 %v965
          %v1046 = vunpack.c.l.b16 %v966
          %v1047 = vunpack.c.l.b16 %v967
          %v1048 = vunpack.c.l.b16 %v968
          %v1049 = vunpack.c.l.b16 %v969
          %v1050 = vunpack.c.l.b16 %v970
          %v1051 = vpack.c.b16 %v1036, %v1035
          %v1052 = vpack.c.b16 %v1038, %v1037
          %v1053 = vpack.c.b16 %v1040, %v1039
          %v1054 = vpack.c.b16 %v1042, %v1041
          %v1055 = vpack.c.b16 %v1044, %v1043
          %v1056 = vpack.c.b16 %v1046, %v1045
          %v1057 = vpack.c.b16 %v1048, %v1047
          %v1058 = vpack.c.b16 %v1050, %v1049
          %1067 = vmatprep.subr.bf16.mxu0 0
          %1068 = vmatpush1.bf16.msra.mxu0 %v1051
          %1069 = vmatprep.subr.bf16.mxu0 0
          %1070 = vmatpush1.bf16.msra.mxu0 %v1052
          %1071 = vmatprep.subr.bf16.mxu0 0
          %1072 = vmatpush1.bf16.msra.mxu0 %v1053
          %1073 = vmatprep.subr.bf16.mxu0 0
          %1074 = vmatpush1.bf16.msra.mxu0 %v1054
          %1075 = vmatprep.subr.bf16.mxu0 0
          %1076 = vmatpush1.bf16.msra.mxu0 %v1055
          %1077 = vmatprep.subr.bf16.mxu0 0
          %1078 = vmatpush1.bf16.msra.mxu0 %v1056
          %1079 = vmatprep.subr.bf16.mxu0 0
          %1080 = vmatpush1.bf16.msra.mxu0 %v1057
          %1081 = vmatprep.subr.bf16.mxu0 0
          %1082 = vmatpush1.bf16.msra.mxu0 %v1058
          %1083 = vmatprep.subr.bf16.mxu0 0
          %1084 = vmatpush1.bf16.msra.mxu0 0
          %1085 = vmatprep.subr.bf16.mxu0 0
          %1086 = vmatpush1.bf16.msra.mxu0 0
          %1087 = vmatprep.subr.bf16.mxu0 0
          %1088 = vmatpush1.bf16.msra.mxu0 0
          %1089 = vmatprep.subr.bf16.mxu0 0
          %1090 = vmatpush1.bf16.msra.mxu0 0
          %1091 = vmatprep.subr.bf16.mxu0 0
          %1092 = vmatpush1.bf16.msra.mxu0 0
          %1093 = vmatprep.subr.bf16.mxu0 0
          %1094 = vmatpush1.bf16.msra.mxu0 0
          %1095 = vmatprep.subr.bf16.mxu0 0
          %1096 = vmatpush1.bf16.msra.mxu0 0
          %1097 = vmatprep.subr.bf16.mxu0 0
          %1098 = vmatpush1.bf16.msra.mxu0 0
          %1099 = vmatprep.mubr.bf16.mxu0 0
          %1100 = vmatmul.mubr.bf16.gmra.mrb[0].mxu0 %v1003
          %v1101 = vpop.f32.mrb[0].mxu0
          %v1102 = vadd.f32 0.0, %v1101
          %v1103 = vpop.f32.mrb[0].mxu0
          %v1104 = vpop.f32.mrb[0].mxu0
          %v1105 = vadd.f32 0.0, %v1104
          %v1106 = vpop.f32.mrb[0].mxu0
          %1107 = vmatprep.mubr.bf16.mxu0 0
          %1108 = vmatmul.mubr.bf16.gmra.mrb[0].mxu0 %v1004
          %v1109 = vpop.f32.mrb[0].mxu0
          %v1110 = vadd.f32 0.0, %v1109
          %v1111 = vpop.f32.mrb[0].mxu0
          %v1112 = vpop.f32.mrb[0].mxu0
          %v1113 = vadd.f32 0.0, %v1112
          %v1114 = vpop.f32.mrb[0].mxu0
          %1115 = vmatprep.mubr.bf16.mxu0 0
          %1116 = vmatmul.mubr.bf16.gmra.mrb[0].mxu0 %v1005
          %v1117 = vpop.f32.mrb[0].mxu0
          %v1118 = vadd.f32 0.0, %v1117
          %v1119 = vpop.f32.mrb[0].mxu0
          %v1120 = vpop.f32.mrb[0].mxu0
          %v1121 = vadd.f32 0.0, %v1120
          %v1122 = vpop.f32.mrb[0].mxu0
          %1123 = vmatprep.mubr.bf16.mxu0 0
          %1124 = vmatmul.mubr.bf16.gmra.mrb[0].mxu0 %v1006
          %v1125 = vpop.f32.mrb[0].mxu0
          %v1126 = vadd.f32 0.0, %v1125
          %v1127 = vpop.f32.mrb[0].mxu0
          %v1128 = vpop.f32.mrb[0].mxu0
          %v1129 = vadd.f32 0.0, %v1128
          %v1130 = vpop.f32.mrb[0].mxu0
          %1131 = vmatprep.mubr.bf16.mxu0 0
          %1132 = vmatmul.mubr.bf16.gmra.mrb[0].mxu0 %v1007
          %v1133 = vpop.f32.mrb[0].mxu0
          %v1134 = vadd.f32 0.0, %v1133
          %v1135 = vpop.f32.mrb[0].mxu0
          %v1136 = vpop.f32.mrb[0].mxu0
          %v1137 = vadd.f32 0.0, %v1136
          %v1138 = vpop.f32.mrb[0].mxu0
          %1139 = vmatprep.mubr.bf16.mxu0 0
          %1140 = vmatmul.mubr.bf16.gmra.mrb[0].mxu0 %v1008
          %v1141 = vpop.f32.mrb[0].mxu0
          %v1142 = vadd.f32 0.0, %v1141
          %v1143 = vpop.f32.mrb[0].mxu0
          %v1144 = vpop.f32.mrb[0].mxu0
          %v1145 = vadd.f32 0.0, %v1144
          %v1146 = vpop.f32.mrb[0].mxu0
          %1147 = vmatprep.mubr.bf16.mxu0 0
          %1148 = vmatmul.mubr.bf16.gmra.mrb[0].mxu0 %v1009
          %v1149 = vpop.f32.mrb[0].mxu0
          %v1150 = vadd.f32 0.0, %v1149
          %v1151 = vpop.f32.mrb[0].mxu0
          %v1152 = vpop.f32.mrb[0].mxu0
          %v1153 = vadd.f32 0.0, %v1152
          %v1154 = vpop.f32.mrb[0].mxu0
          %1155 = vmatprep.mubr.bf16.mxu0 0
          %1156 = vmatmul.mubr.bf16.gmra.mrb[0].mxu0 %v1010
          %v1157 = vpop.f32.mrb[0].mxu0
          %v1158 = vadd.f32 0.0, %v1157
          %v1159 = vpop.f32.mrb[0].mxu0
          %v1160 = vpop.f32.mrb[0].mxu0
          %v1161 = vadd.f32 0.0, %v1160
          %v1162 = vpop.f32.mrb[0].mxu0
          %1163 = vdwg.mxu0
          %v1180 = vunpack.c.l.b16 %v923
          %v1181 = vunpack.c.l.b16 %v924
          %v1182 = vunpack.c.l.b16 %v925
          %v1183 = vunpack.c.l.b16 %v926
          %v1184 = vunpack.c.l.b16 %v927
          %v1185 = vunpack.c.l.b16 %v928
          %v1186 = vunpack.c.l.b16 %v929
          %v1187 = vunpack.c.l.b16 %v930
          %v1188 = vunpack.c.l.b16 %v931
          %v1189 = vunpack.c.l.b16 %v932
          %v1190 = vunpack.c.l.b16 %v933
          %v1191 = vunpack.c.l.b16 %v934
          %v1192 = vunpack.c.l.b16 %v935
          %v1193 = vunpack.c.l.b16 %v936
          %v1194 = vunpack.c.l.b16 %v937
          %v1195 = vunpack.c.l.b16 %v938
          %v1196 = vpack.c.b16 %v1181, %v1180
          %v1197 = vpack.c.b16 %v1183, %v1182
          %v1198 = vpack.c.b16 %v1185, %v1184
          %v1199 = vpack.c.b16 %v1187, %v1186
          %v1200 = vpack.c.b16 %v1189, %v1188
          %v1201 = vpack.c.b16 %v1191, %v1190
          %v1202 = vpack.c.b16 %v1193, %v1192
          %v1203 = vpack.c.b16 %v1195, %v1194
          %1212 = vmatprep.subr.bf16.mxu0 0
          %1213 = vmatpush1.bf16.msra.mxu0 %v1196
          %1214 = vmatprep.subr.bf16.mxu0 0
          %1215 = vmatpush1.bf16.msra.mxu0 %v1197
          %1216 = vmatprep.subr.bf16.mxu0 0
          %1217 = vmatpush1.bf16.msra.mxu0 %v1198
          %1218 = vmatprep.subr.bf16.mxu0 0
          %1219 = vmatpush1.bf16.msra.mxu0 %v1199
          %1220 = vmatprep.subr.bf16.mxu0 0
          %1221 = vmatpush1.bf16.msra.mxu0 %v1200
          %1222 = vmatprep.subr.bf16.mxu0 0
          %1223 = vmatpush1.bf16.msra.mxu0 %v1201
          %1224 = vmatprep.subr.bf16.mxu0 0
          %1225 = vmatpush1.bf16.msra.mxu0 %v1202
          %1226 = vmatprep.subr.bf16.mxu0 0
          %1227 = vmatpush1.bf16.msra.mxu0 %v1203
          %1228 = vmatprep.subr.bf16.mxu0 0
          %1229 = vmatpush1.bf16.msra.mxu0 0
          %1230 = vmatprep.subr.bf16.mxu0 0
          %1231 = vmatpush1.bf16.msra.mxu0 0
          %1232 = vmatprep.subr.bf16.mxu0 0
          %1233 = vmatpush1.bf16.msra.mxu0 0
          %1234 = vmatprep.subr.bf16.mxu0 0
          %1235 = vmatpush1.bf16.msra.mxu0 0
          %1236 = vmatprep.subr.bf16.mxu0 0
          %1237 = vmatpush1.bf16.msra.mxu0 0
          %1238 = vmatprep.subr.bf16.mxu0 0
          %1239 = vmatpush1.bf16.msra.mxu0 0
          %1240 = vmatprep.subr.bf16.mxu0 0
          %1241 = vmatpush1.bf16.msra.mxu0 0
          %1242 = vmatprep.subr.bf16.mxu0 0
          %1243 = vmatpush1.bf16.msra.mxu0 0
          %1244 = vmatprep.mubr.bf16.mxu0 0
          %1245 = vmatmul.mubr.bf16.gmra.mrb[0].mxu0 %v915
          %v1246 = vpop.f32.mrb[0].mxu0
          %v1247 = vadd.f32 %v1102, %v1246
          %v1248 = vpop.f32.mrb[0].mxu0
          %v1249 = vpop.f32.mrb[0].mxu0
          %v1250 = vadd.f32 %v1105, %v1249
          %v1251 = vpop.f32.mrb[0].mxu0
          %1252 = vmatprep.mubr.bf16.mxu0 0
          %1253 = vmatmul.mubr.bf16.gmra.mrb[0].mxu0 %v916
          %v1254 = vpop.f32.mrb[0].mxu0
          %v1255 = vadd.f32 %v1110, %v1254
          %v1256 = vpop.f32.mrb[0].mxu0
          %v1257 = vpop.f32.mrb[0].mxu0
          %v1258 = vadd.f32 %v1113, %v1257
          %v1259 = vpop.f32.mrb[0].mxu0
          %1260 = vmatprep.mubr.bf16.mxu0 0
          %1261 = vmatmul.mubr.bf16.gmra.mrb[0].mxu0 %v917
          %v1262 = vpop.f32.mrb[0].mxu0
          %v1263 = vadd.f32 %v1118, %v1262
          %v1264 = vpop.f32.mrb[0].mxu0
          %v1265 = vpop.f32.mrb[0].mxu0
          %v1266 = vadd.f32 %v1121, %v1265
          %v1267 = vpop.f32.mrb[0].mxu0
          %1268 = vmatprep.mubr.bf16.mxu0 0
          %1269 = vmatmul.mubr.bf16.gmra.mrb[0].mxu0 %v918
          %v1270 = vpop.f32.mrb[0].mxu0
          %v1271 = vadd.f32 %v1126, %v1270
          %v1272 = vpop.f32.mrb[0].mxu0
          %v1273 = vpop.f32.mrb[0].mxu0
          %v1274 = vadd.f32 %v1129, %v1273
          %v1275 = vpop.f32.mrb[0].mxu0
          %1276 = vmatprep.mubr.bf16.mxu0 0
          %1277 = vmatmul.mubr.bf16.gmra.mrb[0].mxu0 %v919
          %v1278 = vpop.f32.mrb[0].mxu0
          %v1279 = vadd.f32 %v1134, %v1278
          %v1280 = vpop.f32.mrb[0].mxu0
          %v1281 = vpop.f32.mrb[0].mxu0
          %v1282 = vadd.f32 %v1137, %v1281
          %v1283 = vpop.f32.mrb[0].mxu0
          %1284 = vmatprep.mubr.bf16.mxu0 0
          %1285 = vmatmul.mubr.bf16.gmra.mrb[0].mxu0 %v920
          %v1286 = vpop.f32.mrb[0].mxu0
          %v1287 = vadd.f32 %v1142, %v1286
          %v1288 = vpop.f32.mrb[0].mxu0
          %v1289 = vpop.f32.mrb[0].mxu0
          %v1290 = vadd.f32 %v1145, %v1289
          %v1291 = vpop.f32.mrb[0].mxu0
          %1292 = vmatprep.mubr.bf16.mxu0 0
          %1293 = vmatmul.mubr.bf16.gmra.mrb[0].mxu0 %v921
          %v1294 = vpop.f32.mrb[0].mxu0
          %v1295 = vadd.f32 %v1150, %v1294
          %v1296 = vpop.f32.mrb[0].mxu0
          %v1297 = vpop.f32.mrb[0].mxu0
          %v1298 = vadd.f32 %v1153, %v1297
          %v1299 = vpop.f32.mrb[0].mxu0
          %1300 = vmatprep.mubr.bf16.mxu0 0
          %1301 = vmatmul.mubr.bf16.gmra.mrb[0].mxu0 %v922
          %v1302 = vpop.f32.mrb[0].mxu0
          %v1303 = vadd.f32 %v1158, %v1302
          %v1304 = vpop.f32.mrb[0].mxu0
          %v1305 = vpop.f32.mrb[0].mxu0
          %v1306 = vadd.f32 %v1161, %v1305
          %v1307 = vpop.f32.mrb[0].mxu0
          %1308 = vdwg.mxu0
          %v1309 = vld [vmem:[%s8] sm:$0x1]
          %v1311 = vlaneseq
          %v1312 = vshrl.u32 %v1311, 7
          %v1313 = vsub.s32 0, %v1312
          %v1314 = vrot.slane %v1309, %v1313
          %v1316 = vadd.f32 %v1247, %v1314
          %v1317 = vadd.f32 %v1250, %v1314
          %v1318 = vadd.f32 %v1255, %v1314
          %v1319 = vadd.f32 %v1258, %v1314
          %v1320 = vadd.f32 %v1263, %v1314
          %v1321 = vadd.f32 %v1266, %v1314
          %v1322 = vadd.f32 %v1271, %v1314
          %v1323 = vadd.f32 %v1274, %v1314
          %v1324 = vadd.f32 %v1279, %v1314
          %v1325 = vadd.f32 %v1282, %v1314
          %v1326 = vadd.f32 %v1287, %v1314
          %v1327 = vadd.f32 %v1290, %v1314
          %v1328 = vadd.f32 %v1295, %v1314
          %v1329 = vadd.f32 %v1298, %v1314
          %v1330 = vadd.f32 %v1303, %v1314
          %v1331 = vadd.f32 %v1306, %v1314
          %v1332 = vmax.f32 %v1316, 0.0
          %v1333 = vmax.f32 %v1317, 0.0
          %v1334 = vmax.f32 %v1318, 0.0
          %v1335 = vmax.f32 %v1319, 0.0
          %v1336 = vmax.f32 %v1320, 0.0
          %v1337 = vmax.f32 %v1321, 0.0
          %v1338 = vmax.f32 %v1322, 0.0
          %v1339 = vmax.f32 %v1323, 0.0
          %v1340 = vmax.f32 %v1324, 0.0
          %v1341 = vmax.f32 %v1325, 0.0
          %v1342 = vmax.f32 %v1326, 0.0
          %v1343 = vmax.f32 %v1327, 0.0
          %v1344 = vmax.f32 %v1328, 0.0
          %v1345 = vmax.f32 %v1329, 0.0
          %v1346 = vmax.f32 %v1330, 0.0
          %v1347 = vmax.f32 %v1331, 0.0
          %v1348 = vpack.c.bf16 %v1333, %v1332
          %v1349 = vpack.c.bf16 %v1335, %v1334
          %v1350 = vpack.c.bf16 %v1337, %v1336
          %v1351 = vpack.c.bf16 %v1339, %v1338
          %v1352 = vpack.c.bf16 %v1341, %v1340
          %v1353 = vpack.c.bf16 %v1343, %v1342
          %v1354 = vpack.c.bf16 %v1345, %v1344
          %v1355 = vpack.c.bf16 %v1347, %v1346
          %v1364 = vunpack.c.l.b16 %v1348
          %v1365 = vunpack.c.h.b16 %v1348
          %v1366 = vunpack.c.l.b16 %v1349
          %v1367 = vunpack.c.h.b16 %v1349
          %v1368 = vunpack.c.l.b16 %v1350
          %v1369 = vunpack.c.h.b16 %v1350
          %v1370 = vunpack.c.l.b16 %v1351
          %v1371 = vunpack.c.h.b16 %v1351
          %v1372 = vunpack.c.l.b16 %v1352
          %v1373 = vunpack.c.h.b16 %v1352
          %v1374 = vunpack.c.l.b16 %v1353
          %v1375 = vunpack.c.h.b16 %v1353
          %v1376 = vunpack.c.l.b16 %v1354
          %v1377 = vunpack.c.h.b16 %v1354
          %v1378 = vunpack.c.l.b16 %v1355
          %v1379 = vunpack.c.h.b16 %v1355
          %v1380 = vpack.c.b16 %v1364, %v1364
          %v1381 = vpack.c.b16 %v1365, %v1365
          %v1382 = vpack.c.b16 %v1366, %v1366
          %v1383 = vpack.c.b16 %v1367, %v1367
          %v1384 = vpack.c.b16 %v1368, %v1368
          %v1385 = vpack.c.b16 %v1369, %v1369
          %v1386 = vpack.c.b16 %v1370, %v1370
          %v1387 = vpack.c.b16 %v1371, %v1371
          %v1388 = vpack.c.b16 %v1372, %v1372
          %v1389 = vpack.c.b16 %v1373, %v1373
          %v1390 = vpack.c.b16 %v1374, %v1374
          %v1391 = vpack.c.b16 %v1375, %v1375
          %v1392 = vpack.c.b16 %v1376, %v1376
          %v1393 = vpack.c.b16 %v1377, %v1377
          %v1394 = vpack.c.b16 %v1378, %v1378
          %v1395 = vpack.c.b16 %v1379, %v1379
          %1412 = vst [vmem:[%s509] sm:$0xf] %v1380
          %1413 = vst [vmem:[%s509 + $0x4] sm:$0xf] %v1381
          %1414 = vst [vmem:[%s509 + $0x8] sm:$0xf] %v1382
          %1415 = vst [vmem:[%s509 + $0xc] sm:$0xf] %v1383
          %1416 = vst [vmem:[%s509 + $0x10] sm:$0xf] %v1384
          %1417 = vst [vmem:[%s509 + $0x14] sm:$0xf] %v1385
          %1418 = vst [vmem:[%s509 + $0x18] sm:$0xf] %v1386
          %1419 = vst [vmem:[%s509 + $0x1c] sm:$0xf] %v1387
          %1420 = vst [vmem:[%s509 + $0x20] sm:$0xf] %v1388
          %1421 = vst [vmem:[%s509 + $0x24] sm:$0xf] %v1389
          %1422 = vst [vmem:[%s509 + $0x28] sm:$0xf] %v1390
          %1423 = vst [vmem:[%s509 + $0x2c] sm:$0xf] %v1391
          %1424 = vst [vmem:[%s509 + $0x30] sm:$0xf] %v1392
          %1425 = vst [vmem:[%s509 + $0x34] sm:$0xf] %v1393
          %1426 = vst [vmem:[%s509 + $0x38] sm:$0xf] %v1394
          %1427 = vst [vmem:[%s509 + $0x3c] sm:$0xf] %v1395
        $region110: #{tpu_custom_call.1} parent=81 // pred_fallthru
          _
        %s1428 = sand.u32 %s260, 1
        %s1429 = scalar_lea.sflag [#allocation9], %s1428
        %s1430 = sand.u32 %s260, 1
        %s1431 = smul.addr %s1430, 64
        %s1432 = scalar_lea.vmem [#allocation13], %s1431
        // Predicated region
        $region111: #{tpu_custom_call.1} parent=81 // pred_check
          %p1433 = pneg %p270
        $region112: #{tpu_custom_call.1} parent=81 // pred_check_branch
          %1435 = sbr.rel (%p1433) target = $region114
        $region113: #{tpu_custom_call.1} parent=81 // pred_region
          %s1436 = smul.u32 16, %s43
          %s1438 = ssub.s32 1024, 1024
          %1439 = vsyncadd %s1429, %s1438
          %s1440 = smul.addr %s1436, 64
          %s1441 = scalar_lea.hbm %s9, %s1440
          %s1442 = sshll.u32 %s1432, 4
          %s1443 = int_to_ptr.vmem [resolvable:$true] %s1442
          %1448 = dma.vmem_to_hbm [thread:$0]  %s1443, 1024, %s1441, %s1429, 64, 64, 4
        $region114: #{tpu_custom_call.1} parent=81 // pred_fallthru
          _
      $region82: #{tpu_custom_call.1} parent=5 // pred_fallthru
        _
      %p1449 = scmp.le.s32.totalorder 2, %s34
      // Predicated region
      $region115: #{tpu_custom_call.1} parent=5 // pred_check
        %p1450 = pneg %p1449
      $region116: #{tpu_custom_call.1} parent=5 // pred_check_branch
        %1452 = sbr.rel (%p1450) target = $region118
      $region117: #{tpu_custom_call.1} parent=5 // pred_region
        %s1453 = ssub.s32 %s34, 2
        // Predicated region
        $region119: #{tpu_custom_call.1} parent=117 // pred_check
          %p1454 = pneg %p276
        $region120: #{tpu_custom_call.1} parent=117 // pred_check_branch
          %1456 = sbr.rel (%p1454) target = $region122
        $region121: #{tpu_custom_call.1} parent=117 // pred_region
          %s1457 = sand.u32 %s261, 1
          %s1458 = scalar_lea.sflag [#allocation9], %s1457
          %s1459 = sand.u32 %s261, 1
          %s1460 = smul.addr %s1459, 64
          %s1461 = scalar_lea.vmem [#allocation13], %s1460
          %1462 = dma.done %s1458, 1024
        $region122: #{tpu_custom_call.1} parent=117 // pred_fallthru
          _
      $region118: #{tpu_custom_call.1} parent=5 // pred_fallthru
        _
    $region6: #{tpu_custom_call.1} parent=1 // loop_footer
      %s38 = sadd.s32 1, %s34
    $region7: #{tpu_custom_call.1} parent=1 // loop_footer_branch
      %33 = sbr.rel target = $region3
    $region8: #{tpu_custom_call.1} parent=1 // loop_exit
      _
    %1463 = vsyncpa [#allocation8], 1
    %s1464 = scalar_lea.sflag [#allocation8], 1
    %1465 = vsyncpa %s1464, 1
    %1466 = vsyncpa [#allocation11], 1
    %s1467 = scalar_lea.sflag [#allocation11], 1
    %1468 = vsyncpa %s1467, 1
    %1469 = vsyncpa [#allocation9], 1
    %s1470 = scalar_lea.sflag [#allocation9], 1
    %1471 = vsyncpa %s1470, 1

</llo_original>
